<compile_context>
chip_gen: v5e
topology: v5e:2x2
jax: 0.10.0
libtpu: 0.0.40
codegen_flags: <defaults>
</compile_context>

<pallas_src>
import functools

import jax
import jax.numpy as jnp
from jax.experimental import pallas as pl
from jax.experimental.pallas import tpu as pltpu

EPS = 1e-5  # PyTorch LayerNorm default


def _layernorm(h, gamma, beta):
    mu = jnp.mean(h, axis=-1, keepdims=True)
    var = jnp.mean((h - mu) ** 2, axis=-1, keepdims=True)
    return (h - mu) * jax.lax.rsqrt(var + EPS) * gamma + beta


def _bottleneck_kernel(num_heads, x_ref, tok_ref, wq_ref, wkv_ref, wo_ref,
                       w1_ref, w2_ref, vecc_ref, bkv_ref, bf1_ref, out_ref):
    """One grid step = one batch element; all blocks iterated (unrolled) inside."""
    S, C = x_ref.shape[1], x_ref.shape[2]
    T = tok_ref.shape[1]
    L = wq_ref.shape[0]
    nh = num_heads
    hd = C // nh

    x = x_ref[0]                                     # (S, C) f32 activations
    tokb = tok_ref[0].astype(jnp.bfloat16)           # (T, C) bf16, reused by all blocks

    for l in range(L):                               # num_blocks is small & static
        vc = vecc_ref[l]                             # (8, C) f32 packed C-wide vectors
        xb = x.astype(jnp.bfloat16)

        # Full-width projections (single well-filled MXU pushes; 1/sqrt(hd) folded
        # into wq / bq at pack time).
        q = jnp.dot(xb, wq_ref[l], preferred_element_type=jnp.float32) + vc[0:1]      # (S, C)
        kv = jnp.dot(tokb, wkv_ref[l], preferred_element_type=jnp.float32) + bkv_ref[l]  # (T, 2C)

        qb = q.astype(jnp.bfloat16)
        kvb = kv.astype(jnp.bfloat16)

        # Head split via static lane slices (hd = C // nh). The attention core is tiny
        # (S=16, T=8, hd=8) so these are cheap copies, not MXU work.
        q_h = jnp.concatenate(
            [qb[None, :, h * hd:(h + 1) * hd] for h in range(nh)], axis=0)       # (H,S,hd)
        k_h = jnp.concatenate(
            [kvb[None, :, h * hd:(h + 1) * hd] for h in range(nh)], axis=0)      # (H,T,hd)
        v_h = jnp.concatenate(
            [kvb[None, :, C + h * hd:C + (h + 1) * hd] for h in range(nh)], axis=0)  # (H,T,hd)

        # Scaled dot-product attention, all heads at once (scale already in wq/bq).
        s = jnp.einsum('hsd,htd->hst', q_h, k_h,
                       preferred_element_type=jnp.float32)                       # (H,S,T)
        s = s - jnp.max(s, axis=-1, keepdims=True)
        p = jnp.exp(s)
        p = p * pl.reciprocal(jnp.sum(p, axis=-1, keepdims=True), approx=True)

        ctx = jnp.einsum('hst,htd->hsd', p.astype(jnp.bfloat16), v_h,
                         preferred_element_type=jnp.float32)                     # (H,S,hd)

        # Merge heads back to lane-major (S, C) and apply the output projection as a
        # single full-width matmul (replaces per-head projection + head-sum).
        ctx_m = jnp.concatenate([ctx[h] for h in range(nh)], axis=-1)            # (S, C)
        attn = jnp.dot(ctx_m.astype(jnp.bfloat16), wo_ref[l],
                       preferred_element_type=jnp.float32) + vc[1:2]

        # Residual + LayerNorm 1 (f32).
        h1 = _layernorm(x + attn, vc[2:3], vc[3:4])

        # FFN: Linear -> ReLU -> Linear (bf16 matmuls, f32 accumulate).
        f = jnp.dot(h1.astype(jnp.bfloat16), w1_ref[l],
                    preferred_element_type=jnp.float32) + bf1_ref[l]
        f = jnp.maximum(f, 0.0)
        f = jnp.dot(f.astype(jnp.bfloat16), w2_ref[l],
                    preferred_element_type=jnp.float32) + vc[4:5]

        # Residual + LayerNorm 2 -> activations for the next block.
        x = _layernorm(h1 + f, vc[5:6], vc[6:7])

    out_ref[0] = x


def bottleneck_forward(x_nchw, tokens_tbc, packed, num_heads):
    """Matches Bottleneck.forward: x (B,C,H,W), tokens (T,B,C) -> (B,C,H,W)."""
    B, C, Hs, Ws = x_nchw.shape
    S = Hs * Ws
    x = x_nchw.reshape(B, C, S).transpose(0, 2, 1)       # (B, S, C)
    tok = tokens_tbc.transpose(1, 0, 2)                  # (B, T, C)
    T = tok.shape[1]

    L = packed["wq"].shape[0]
    F = packed["w1"].shape[2]

    full = lambda b: (0, 0, 0)   # weights: one full-extent block, loaded once & reused

    out = pl.pallas_call(
        functools.partial(_bottleneck_kernel, num_heads),
        out_shape=jax.ShapeDtypeStruct((B, S, C), jnp.float32),
        grid=(B,),
        in_specs=[
            pl.BlockSpec((1, S, C), lambda b: (b, 0, 0)),     # x (aliased to output)
            pl.BlockSpec((1, T, C), lambda b: (b, 0, 0)),     # tokens
            pl.BlockSpec((L, C, C), full),                    # wq (scale folded in)
            pl.BlockSpec((L, C, 2 * C), full),                # [wk | wv]
            pl.BlockSpec((L, C, C), full),                    # wo
            pl.BlockSpec((L, C, F), full),                    # ffn w1
            pl.BlockSpec((L, F, C), full),                    # ffn w2
            pl.BlockSpec((L, 8, C), full),                    # [bq*s, bo, g1, be1, bf2, g2, be2, 0]
            pl.BlockSpec((L, 1, 2 * C), full),                # [bk | bv]
            pl.BlockSpec((L, 1, F), full),                    # ffn b1
        ],
        out_specs=pl.BlockSpec((1, S, C), lambda b: (b, 0, 0)),
        input_output_aliases={0: 0},
        compiler_params=pltpu.CompilerParams(
            dimension_semantics=("parallel",)),
    )(x, tok, packed["wq"], packed["wkv"], packed["wo"], packed["w1"],
      packed["w2"], packed["vec_c"], packed["bkv"], packed["bf1"])

    return out.transpose(0, 2, 1).reshape(B, C, Hs, Ws)


def pack_block_params(blocks, num_heads):
    """Stack per-block params into a few lane-major, kernel-friendly arrays."""
    C = blocks[0]["wq"].shape[0]
    F = blocks[0]["w1"].shape[1]
    hd = C // num_heads
    scale = 1.0 / float(hd) ** 0.5

    wq = jnp.stack([blk["wq"] * scale for blk in blocks])                          # (L,C,C)
    wkv = jnp.stack([jnp.concatenate([blk["wk"], blk["wv"]], axis=1)
                     for blk in blocks])                                           # (L,C,2C)
    wo = jnp.stack([blk["wo"] for blk in blocks])                                  # (L,C,C)
    w1 = jnp.stack([blk["w1"] for blk in blocks])                                  # (L,C,F)
    w2 = jnp.stack([blk["w2"] for blk in blocks])                                  # (L,F,C)
    zeros_c = jnp.zeros((C,), jnp.float32)
    vec_c = jnp.stack([jnp.stack([blk["bq"] * scale, blk["bo"], blk["g1"],
                                  blk["be1"], blk["bf2"], blk["g2"], blk["be2"],
                                  zeros_c]) for blk in blocks])                    # (L,8,C)
    bkv = jnp.stack([jnp.concatenate([blk["bk"], blk["bv"]]).reshape(1, 2 * C)
                     for blk in blocks])                                           # (L,1,2C)
    bf1 = jnp.stack([blk["bf1"].reshape(1, F) for blk in blocks])                  # (L,1,F)
    return dict(
        wq=wq.astype(jnp.bfloat16), wkv=wkv.astype(jnp.bfloat16),
        wo=wo.astype(jnp.bfloat16), w1=w1.astype(jnp.bfloat16),
        w2=w2.astype(jnp.bfloat16), vec_c=vec_c.astype(jnp.float32),
        bkv=bkv.astype(jnp.float32), bf1=bf1.astype(jnp.float32))


def bottleneck_reference(x_nchw, tokens_tbc, blocks, num_heads):
    """Pure-JAX f32 reference of the same forward pass (for validation)."""
    B, C, Hs, Ws = x_nchw.shape
    S = Hs * Ws
    x = x_nchw.reshape(B, C, S).transpose(0, 2, 1)       # (B, S, C)
    tok = tokens_tbc.transpose(1, 0, 2)                  # (B, T, C)
    T = tok.shape[1]
    hd = C // num_heads
    scale = 1.0 / float(hd) ** 0.5
    for p in blocks:
        q = x @ p["wq"] + p["bq"]
        k = tok @ p["wk"] + p["bk"]
        v = tok @ p["wv"] + p["bv"]
        qh = q.reshape(B, S, num_heads, hd).transpose(0, 2, 1, 3)
        kh = k.reshape(B, T, num_heads, hd).transpose(0, 2, 1, 3)
        vh = v.reshape(B, T, num_heads, hd).transpose(0, 2, 1, 3)
        s = jnp.einsum('bhsd,bhtd->bhst', qh, kh) * scale
        a = jax.nn.softmax(s, axis=-1)
        ctx = jnp.einsum('bhst,bhtd->bhsd', a, vh)
        ctx = ctx.transpose(0, 2, 1, 3).reshape(B, S, C)
        attn = ctx @ p["wo"] + p["bo"]
        h1 = _layernorm(x + attn, p["g1"], p["be1"])
        f = jnp.maximum(h1 @ p["w1"] + p["bf1"], 0.0)
        f = f @ p["w2"] + p["bf2"]
        x = _layernorm(h1 + f, p["g2"], p["be2"])
    return x.transpose(0, 2, 1).reshape(B, C, Hs, Ws)


def init_block_params(key, C, F, w_scale=0.05):
    ks = jax.random.split(key, 16)
    w = lambda k, shape: w_scale * jax.random.normal(k, shape, jnp.float32)
    return dict(
        wq=w(ks[0], (C, C)), bq=w(ks[1], (C,)),
        wk=w(ks[2], (C, C)), bk=w(ks[3], (C,)),
        wv=w(ks[4], (C, C)), bv=w(ks[5], (C,)),
        wo=w(ks[6], (C, C)), bo=w(ks[7], (C,)),
        g1=1.0 + w(ks[8], (C,)), be1=w(ks[9], (C,)),
        w1=w(ks[10], (C, F)), bf1=w(ks[11], (F,)),
        w2=w(ks[12], (F, C)), bf2=w(ks[13], (C,)),
        g2=1.0 + w(ks[14], (C,)), be2=w(ks[15], (C,)),
    )


if __name__ == "__main__":
    # Shapes consistent with the module: in_channels=32, num_heads=4,
    # ffn_hidden_dim=64, num_blocks=2, spatial 4x4 (S=16), 8 cross tokens.
    B, C, Hs, Ws = 2, 32, 4, 4
    num_heads, ffn_hidden_dim, T, num_blocks = 4, 64, 8, 2

    key = jax.random.PRNGKey(0)
    kx, kt, kp = jax.random.split(key, 3)
    x = jax.random.normal(kx, (B, C, Hs, Ws), jnp.float32)
    tokens = jax.random.normal(kt, (T, B, C), jnp.float32)   # PyTorch MHA seq-first layout
    blocks = [init_block_params(jax.random.fold_in(kp, i), C, ffn_hidden_dim)
              for i in range(num_blocks)]
    packed = pack_block_params(blocks, num_heads)

    fwd = jax.jit(bottleneck_forward, static_argnames=("num_heads",))
    y = jax.block_until_ready(fwd(x, tokens, packed, num_heads=num_heads))

    assert y.shape == (B, C, Hs, Ws), y.shape
    assert bool(jnp.all(jnp.isfinite(y)))

    # Validate against the f32 pure-JAX reference (tolerance covers bf16 matmuls
    # + approximate reciprocal in the kernel; tightened vs. previous revision).
    y_ref = bottleneck_reference(x, tokens, blocks, num_heads)
    max_err = float(jnp.max(jnp.abs(y - y_ref)))
    rel_err = max_err / (float(jnp.max(jnp.abs(y_ref))) + 1e-6)
    assert max_err < 0.1, f"max abs error {max_err} (rel {rel_err})"
    print("KERNEL_OK")
</pallas_src>

<mosaic_0001>
module attributes {stable_mosaic.version = 11 : i64} {
  func.func @_bottleneck_kernel(%arg0: i32, %arg1: memref<1x16x32xf32, #tpu.memory_space<vmem>>, %arg2: memref<1x8x32xf32, #tpu.memory_space<vmem>>, %arg3: memref<2x32x32xbf16, #tpu.memory_space<vmem>>, %arg4: memref<2x32x64xbf16, #tpu.memory_space<vmem>>, %arg5: memref<2x32x32xbf16, #tpu.memory_space<vmem>>, %arg6: memref<2x32x64xbf16, #tpu.memory_space<vmem>>, %arg7: memref<2x64x32xbf16, #tpu.memory_space<vmem>>, %arg8: memref<2x8x32xf32, #tpu.memory_space<vmem>>, %arg9: memref<2x1x64xf32, #tpu.memory_space<vmem>>, %arg10: memref<2x1x64xf32, #tpu.memory_space<vmem>>, %arg11: memref<1x16x32xf32, #tpu.memory_space<vmem>>) attributes {dimension_semantics = [#tpu.dimension_semantics<parallel>], iteration_bounds = array<i64: 2>, scalar_prefetch = 0 : i64, scratch_operands = 0 : i64, tpu.core_type = #tpu.core_type<tc>, window_params = [{transform_indices = @transform_0, window_bounds = array<i64: 1, 16, 32>}, {transform_indices = @transform_1, window_bounds = array<i64: 1, 8, 32>}, {pipeline_mode = #tpu.pipeline_mode<synchronous>, transform_indices = @transform_2, window_bounds = array<i64: 2, 32, 32>}, {pipeline_mode = #tpu.pipeline_mode<synchronous>, transform_indices = @transform_3, window_bounds = array<i64: 2, 32, 64>}, {pipeline_mode = #tpu.pipeline_mode<synchronous>, transform_indices = @transform_4, window_bounds = array<i64: 2, 32, 32>}, {pipeline_mode = #tpu.pipeline_mode<synchronous>, transform_indices = @transform_5, window_bounds = array<i64: 2, 32, 64>}, {pipeline_mode = #tpu.pipeline_mode<synchronous>, transform_indices = @transform_6, window_bounds = array<i64: 2, 64, 32>}, {pipeline_mode = #tpu.pipeline_mode<synchronous>, transform_indices = @transform_7, window_bounds = array<i64: 2, 8, 32>}, {pipeline_mode = #tpu.pipeline_mode<synchronous>, transform_indices = @transform_8, window_bounds = array<i64: 2, 1, 64>}, {pipeline_mode = #tpu.pipeline_mode<synchronous>, transform_indices = @transform_9, window_bounds = array<i64: 2, 1, 64>}, {transform_indices = @transform_10, window_bounds = array<i64: 1, 16, 32>}]} {
    %c0 = arith.constant 0 : index
    %c0_0 = arith.constant 0 : index
    %c0_1 = arith.constant 0 : index
    %0 = vector.load %arg1[%c0, %c0_0, %c0_1] : memref<1x16x32xf32, #tpu.memory_space<vmem>>, vector<1x16x32xf32>
    %1 = vector.shape_cast %0 : vector<1x16x32xf32> to vector<16x32xf32>
    %c0_2 = arith.constant 0 : index
    %c0_3 = arith.constant 0 : index
    %c0_4 = arith.constant 0 : index
    %2 = vector.load %arg2[%c0_2, %c0_3, %c0_4] : memref<1x8x32xf32, #tpu.memory_space<vmem>>, vector<1x8x32xf32>
    %3 = vector.shape_cast %2 : vector<1x8x32xf32> to vector<8x32xf32>
    %4 = arith.truncf %3 : vector<8x32xf32> to vector<8x32xbf16>
    %c0_5 = arith.constant 0 : index
    %c0_6 = arith.constant 0 : index
    %c0_7 = arith.constant 0 : index
    %5 = vector.load %arg8[%c0_5, %c0_6, %c0_7] : memref<2x8x32xf32, #tpu.memory_space<vmem>>, vector<1x8x32xf32>
    %6 = vector.shape_cast %5 : vector<1x8x32xf32> to vector<8x32xf32>
    %7 = arith.truncf %1 : vector<16x32xf32> to vector<16x32xbf16>
    %c0_8 = arith.constant 0 : index
    %c0_9 = arith.constant 0 : index
    %c0_10 = arith.constant 0 : index
    %8 = vector.load %arg3[%c0_8, %c0_9, %c0_10] : memref<2x32x32xbf16, #tpu.memory_space<vmem>>, vector<1x32x32xbf16>
    %9 = vector.shape_cast %8 : vector<1x32x32xbf16> to vector<32x32xbf16>
    %cst = arith.constant dense<0.000000e+00> : vector<16x32xf32>
    %10 = tpu.matmul %7, %9, %cst {dimension_numbers = #tpu.dot_dimension_numbers<[1], [0], [0], [1], [0, 0, 1, 1], [], []>} : vector<16x32xbf16>, vector<32x32xbf16>, vector<16x32xf32> -> vector<16x32xf32>
    %11 = vector.extract_strided_slice %6 {offsets = [0, 0], sizes = [1, 32], strides = [1, 1]} : vector<8x32xf32> to vector<1x32xf32>
    %12 = vector.broadcast %11 : vector<1x32xf32> to vector<16x32xf32>
    %13 = arith.addf %10, %12 : vector<16x32xf32>
    %c0_11 = arith.constant 0 : index
    %c0_12 = arith.constant 0 : index
    %c0_13 = arith.constant 0 : index
    %14 = vector.load %arg4[%c0_11, %c0_12, %c0_13] : memref<2x32x64xbf16, #tpu.memory_space<vmem>>, vector<1x32x64xbf16>
    %15 = vector.shape_cast %14 : vector<1x32x64xbf16> to vector<32x64xbf16>
    %cst_14 = arith.constant dense<0.000000e+00> : vector<8x64xf32>
    %16 = tpu.matmul %4, %15, %cst_14 {dimension_numbers = #tpu.dot_dimension_numbers<[1], [0], [0], [1], [0, 0, 1, 1], [], []>} : vector<8x32xbf16>, vector<32x64xbf16>, vector<8x64xf32> -> vector<8x64xf32>
    %c0_15 = arith.constant 0 : index
    %c0_16 = arith.constant 0 : index
    %c0_17 = arith.constant 0 : index
    %17 = vector.load %arg9[%c0_15, %c0_16, %c0_17] : memref<2x1x64xf32, #tpu.memory_space<vmem>>, vector<1x1x64xf32>
    %18 = vector.shape_cast %17 : vector<1x1x64xf32> to vector<1x64xf32>
    %19 = vector.broadcast %18 : vector<1x64xf32> to vector<8x64xf32>
    %20 = arith.addf %16, %19 : vector<8x64xf32>
    %21 = arith.truncf %13 : vector<16x32xf32> to vector<16x32xbf16>
    %22 = arith.truncf %20 : vector<8x64xf32> to vector<8x64xbf16>
    %23 = vector.extract_strided_slice %21 {offsets = [0, 0], sizes = [16, 8], strides = [1, 1]} : vector<16x32xbf16> to vector<16x8xbf16>
    %24 = vector.shape_cast %23 : vector<16x8xbf16> to vector<1x16x8xbf16>
    %25 = vector.extract_strided_slice %21 {offsets = [0, 8], sizes = [16, 8], strides = [1, 1]} : vector<16x32xbf16> to vector<16x8xbf16>
    %26 = vector.shape_cast %25 : vector<16x8xbf16> to vector<1x16x8xbf16>
    %27 = vector.extract_strided_slice %21 {offsets = [0, 16], sizes = [16, 8], strides = [1, 1]} : vector<16x32xbf16> to vector<16x8xbf16>
    %28 = vector.shape_cast %27 : vector<16x8xbf16> to vector<1x16x8xbf16>
    %29 = vector.extract_strided_slice %21 {offsets = [0, 24], sizes = [16, 8], strides = [1, 1]} : vector<16x32xbf16> to vector<16x8xbf16>
    %30 = vector.shape_cast %29 : vector<16x8xbf16> to vector<1x16x8xbf16>
    %31 = tpu.concatenate %24, %26, %28, %30 in 0 : vector<1x16x8xbf16>, vector<1x16x8xbf16>, vector<1x16x8xbf16>, vector<1x16x8xbf16> -> vector<4x16x8xbf16>
    %32 = vector.extract_strided_slice %22 {offsets = [0, 0], sizes = [8, 8], strides = [1, 1]} : vector<8x64xbf16> to vector<8x8xbf16>
    %33 = vector.shape_cast %32 : vector<8x8xbf16> to vector<1x8x8xbf16>
    %34 = vector.extract_strided_slice %22 {offsets = [0, 8], sizes = [8, 8], strides = [1, 1]} : vector<8x64xbf16> to vector<8x8xbf16>
    %35 = vector.shape_cast %34 : vector<8x8xbf16> to vector<1x8x8xbf16>
    %36 = vector.extract_strided_slice %22 {offsets = [0, 16], sizes = [8, 8], strides = [1, 1]} : vector<8x64xbf16> to vector<8x8xbf16>
    %37 = vector.shape_cast %36 : vector<8x8xbf16> to vector<1x8x8xbf16>
    %38 = vector.extract_strided_slice %22 {offsets = [0, 24], sizes = [8, 8], strides = [1, 1]} : vector<8x64xbf16> to vector<8x8xbf16>
    %39 = vector.shape_cast %38 : vector<8x8xbf16> to vector<1x8x8xbf16>
    %40 = tpu.concatenate %33, %35, %37, %39 in 0 : vector<1x8x8xbf16>, vector<1x8x8xbf16>, vector<1x8x8xbf16>, vector<1x8x8xbf16> -> vector<4x8x8xbf16>
    %41 = vector.extract_strided_slice %22 {offsets = [0, 32], sizes = [8, 8], strides = [1, 1]} : vector<8x64xbf16> to vector<8x8xbf16>
    %42 = vector.shape_cast %41 : vector<8x8xbf16> to vector<1x8x8xbf16>
    %43 = vector.extract_strided_slice %22 {offsets = [0, 40], sizes = [8, 8], strides = [1, 1]} : vector<8x64xbf16> to vector<8x8xbf16>
    %44 = vector.shape_cast %43 : vector<8x8xbf16> to vector<1x8x8xbf16>
    %45 = vector.extract_strided_slice %22 {offsets = [0, 48], sizes = [8, 8], strides = [1, 1]} : vector<8x64xbf16> to vector<8x8xbf16>
    %46 = vector.shape_cast %45 : vector<8x8xbf16> to vector<1x8x8xbf16>
    %47 = vector.extract_strided_slice %22 {offsets = [0, 56], sizes = [8, 8], strides = [1, 1]} : vector<8x64xbf16> to vector<8x8xbf16>
    %48 = vector.shape_cast %47 : vector<8x8xbf16> to vector<1x8x8xbf16>
    %49 = tpu.concatenate %42, %44, %46, %48 in 0 : vector<1x8x8xbf16>, vector<1x8x8xbf16>, vector<1x8x8xbf16>, vector<1x8x8xbf16> -> vector<4x8x8xbf16>
    "tpu.trace_start"() <{level = 10 : i32, message = "hsd,htd->hst"}> : () -> ()
    %cst_18 = arith.constant dense<0.000000e+00> : vector<4x16x8xf32>
    %50 = tpu.matmul %31, %40, %cst_18 {dimension_numbers = #tpu.dot_dimension_numbers<[2], [2], [1], [1], [0, 0, 0, 1, 1, 1], [0], [0]>} : vector<4x16x8xbf16>, vector<4x8x8xbf16>, vector<4x16x8xf32> -> vector<4x16x8xf32>
    "tpu.trace_stop"() : () -> ()
    %cst_19 = arith.constant dense<0xFF800000> : vector<4x16xf32>
    %51 = vector.multi_reduction <maximumf>, %50, %cst_19 [2] : vector<4x16x8xf32> to vector<4x16xf32>
    %52 = vector.shape_cast %51 : vector<4x16xf32> to vector<4x16x1xf32>
    %53 = vector.broadcast %52 : vector<4x16x1xf32> to vector<4x16x8xf32>
    %54 = arith.subf %50, %53 : vector<4x16x8xf32>
    %55 = math.exp %54 : vector<4x16x8xf32>
    %cst_20 = arith.constant dense<0.000000e+00> : vector<4x16xf32>
    %56 = vector.multi_reduction <add>, %55, %cst_20 [2] : vector<4x16x8xf32> to vector<4x16xf32>
    %57 = vector.shape_cast %56 : vector<4x16xf32> to vector<4x16x1xf32>
    %58 = tpu.reciprocal %57 {approx = true} : vector<4x16x1xf32> -> vector<4x16x1xf32>
    %59 = vector.broadcast %58 : vector<4x16x1xf32> to vector<4x16x8xf32>
    %60 = arith.mulf %55, %59 : vector<4x16x8xf32>
    %61 = arith.truncf %60 : vector<4x16x8xf32> to vector<4x16x8xbf16>
    "tpu.trace_start"() <{level = 10 : i32, message = "hst,htd->hsd"}> : () -> ()
    %cst_21 = arith.constant dense<0.000000e+00> : vector<4x16x8xf32>
    %62 = tpu.matmul %61, %49, %cst_21 {dimension_numbers = #tpu.dot_dimension_numbers<[2], [1], [1], [2], [0, 0, 0, 1, 1, 2], [0], [0]>} : vector<4x16x8xbf16>, vector<4x8x8xbf16>, vector<4x16x8xf32> -> vector<4x16x8xf32>
    "tpu.trace_stop"() : () -> ()
    %63 = vector.extract_strided_slice %62 {offsets = [0, 0, 0], sizes = [1, 16, 8], strides = [1, 1, 1]} : vector<4x16x8xf32> to vector<1x16x8xf32>
    %64 = vector.shape_cast %63 : vector<1x16x8xf32> to vector<16x8xf32>
    %65 = vector.extract_strided_slice %62 {offsets = [1, 0, 0], sizes = [1, 16, 8], strides = [1, 1, 1]} : vector<4x16x8xf32> to vector<1x16x8xf32>
    %66 = vector.shape_cast %65 : vector<1x16x8xf32> to vector<16x8xf32>
    %67 = vector.extract_strided_slice %62 {offsets = [2, 0, 0], sizes = [1, 16, 8], strides = [1, 1, 1]} : vector<4x16x8xf32> to vector<1x16x8xf32>
    %68 = vector.shape_cast %67 : vector<1x16x8xf32> to vector<16x8xf32>
    %69 = vector.extract_strided_slice %62 {offsets = [3, 0, 0], sizes = [1, 16, 8], strides = [1, 1, 1]} : vector<4x16x8xf32> to vector<1x16x8xf32>
    %70 = vector.shape_cast %69 : vector<1x16x8xf32> to vector<16x8xf32>
    %71 = tpu.concatenate %64, %66, %68, %70 in 1 : vector<16x8xf32>, vector<16x8xf32>, vector<16x8xf32>, vector<16x8xf32> -> vector<16x32xf32>
    %72 = arith.truncf %71 : vector<16x32xf32> to vector<16x32xbf16>
    %c0_22 = arith.constant 0 : index
    %c0_23 = arith.constant 0 : index
    %c0_24 = arith.constant 0 : index
    %73 = vector.load %arg5[%c0_22, %c0_23, %c0_24] : memref<2x32x32xbf16, #tpu.memory_space<vmem>>, vector<1x32x32xbf16>
    %74 = vector.shape_cast %73 : vector<1x32x32xbf16> to vector<32x32xbf16>
    %cst_25 = arith.constant dense<0.000000e+00> : vector<16x32xf32>
    %75 = tpu.matmul %72, %74, %cst_25 {dimension_numbers = #tpu.dot_dimension_numbers<[1], [0], [0], [1], [0, 0, 1, 1], [], []>} : vector<16x32xbf16>, vector<32x32xbf16>, vector<16x32xf32> -> vector<16x32xf32>
    %76 = vector.extract_strided_slice %6 {offsets = [1, 0], sizes = [1, 32], strides = [1, 1]} : vector<8x32xf32> to vector<1x32xf32>
    %77 = vector.broadcast %76 : vector<1x32xf32> to vector<16x32xf32>
    %78 = arith.addf %75, %77 : vector<16x32xf32>
    %79 = arith.addf %1, %78 : vector<16x32xf32>
    %80 = vector.extract_strided_slice %6 {offsets = [2, 0], sizes = [1, 32], strides = [1, 1]} : vector<8x32xf32> to vector<1x32xf32>
    %81 = vector.extract_strided_slice %6 {offsets = [3, 0], sizes = [1, 32], strides = [1, 1]} : vector<8x32xf32> to vector<1x32xf32>
    %cst_26 = arith.constant dense<0.000000e+00> : vector<16xf32>
    %82 = vector.multi_reduction <add>, %79, %cst_26 [1] : vector<16x32xf32> to vector<16xf32>
    %83 = vector.shape_cast %82 : vector<16xf32> to vector<16x1xf32>
    %cst_27 = arith.constant 3.200000e+01 : f32
    %84 = vector.broadcast %cst_27 : f32 to vector<16x1xf32>
    %85 = arith.divf %83, %84 : vector<16x1xf32>
    %86 = vector.broadcast %85 : vector<16x1xf32> to vector<16x32xf32>
    %87 = arith.subf %79, %86 : vector<16x32xf32>
    %88 = arith.mulf %87, %87 : vector<16x32xf32>
    %cst_28 = arith.constant dense<0.000000e+00> : vector<16xf32>
    %89 = vector.multi_reduction <add>, %88, %cst_28 [1] : vector<16x32xf32> to vector<16xf32>
    %90 = vector.shape_cast %89 : vector<16xf32> to vector<16x1xf32>
    %cst_29 = arith.constant 3.200000e+01 : f32
    %91 = vector.broadcast %cst_29 : f32 to vector<16x1xf32>
    %92 = arith.divf %90, %91 : vector<16x1xf32>
    %93 = vector.broadcast %85 : vector<16x1xf32> to vector<16x32xf32>
    %94 = arith.subf %79, %93 : vector<16x32xf32>
    %cst_30 = arith.constant 9.99999974E-6 : f32
    %95 = vector.broadcast %cst_30 : f32 to vector<16x1xf32>
    %96 = arith.addf %92, %95 : vector<16x1xf32>
    %97 = math.rsqrt %96 : vector<16x1xf32>
    %98 = vector.broadcast %97 : vector<16x1xf32> to vector<16x32xf32>
    %99 = arith.mulf %94, %98 : vector<16x32xf32>
    %100 = vector.broadcast %80 : vector<1x32xf32> to vector<16x32xf32>
    %101 = arith.mulf %99, %100 : vector<16x32xf32>
    %102 = vector.broadcast %81 : vector<1x32xf32> to vector<16x32xf32>
    %103 = arith.addf %101, %102 : vector<16x32xf32>
    %104 = arith.truncf %103 : vector<16x32xf32> to vector<16x32xbf16>
    %c0_31 = arith.constant 0 : index
    %c0_32 = arith.constant 0 : index
    %c0_33 = arith.constant 0 : index
    %105 = vector.load %arg6[%c0_31, %c0_32, %c0_33] : memref<2x32x64xbf16, #tpu.memory_space<vmem>>, vector<1x32x64xbf16>
    %106 = vector.shape_cast %105 : vector<1x32x64xbf16> to vector<32x64xbf16>
    %cst_34 = arith.constant dense<0.000000e+00> : vector<16x64xf32>
    %107 = tpu.matmul %104, %106, %cst_34 {dimension_numbers = #tpu.dot_dimension_numbers<[1], [0], [0], [1], [0, 0, 1, 1], [], []>} : vector<16x32xbf16>, vector<32x64xbf16>, vector<16x64xf32> -> vector<16x64xf32>
    %c0_35 = arith.constant 0 : index
    %c0_36 = arith.constant 0 : index
    %c0_37 = arith.constant 0 : index
    %108 = vector.load %arg10[%c0_35, %c0_36, %c0_37] : memref<2x1x64xf32, #tpu.memory_space<vmem>>, vector<1x1x64xf32>
    %109 = vector.shape_cast %108 : vector<1x1x64xf32> to vector<1x64xf32>
    %110 = vector.broadcast %109 : vector<1x64xf32> to vector<16x64xf32>
    %111 = arith.addf %107, %110 : vector<16x64xf32>
    %cst_38 = arith.constant 0.000000e+00 : f32
    %112 = vector.broadcast %cst_38 : f32 to vector<16x64xf32>
    %113 = arith.maximumf %111, %112 : vector<16x64xf32>
    %114 = arith.truncf %113 : vector<16x64xf32> to vector<16x64xbf16>
    %c0_39 = arith.constant 0 : index
    %c0_40 = arith.constant 0 : index
    %c0_41 = arith.constant 0 : index
    %115 = vector.load %arg7[%c0_39, %c0_40, %c0_41] : memref<2x64x32xbf16, #tpu.memory_space<vmem>>, vector<1x64x32xbf16>
    %116 = vector.shape_cast %115 : vector<1x64x32xbf16> to vector<64x32xbf16>
    %cst_42 = arith.constant dense<0.000000e+00> : vector<16x32xf32>
    %117 = tpu.matmul %114, %116, %cst_42 {dimension_numbers = #tpu.dot_dimension_numbers<[1], [0], [0], [1], [0, 0, 1, 1], [], []>} : vector<16x64xbf16>, vector<64x32xbf16>, vector<16x32xf32> -> vector<16x32xf32>
    %118 = vector.extract_strided_slice %6 {offsets = [4, 0], sizes = [1, 32], strides = [1, 1]} : vector<8x32xf32> to vector<1x32xf32>
    %119 = vector.broadcast %118 : vector<1x32xf32> to vector<16x32xf32>
    %120 = arith.addf %117, %119 : vector<16x32xf32>
    %121 = arith.addf %103, %120 : vector<16x32xf32>
    %122 = vector.extract_strided_slice %6 {offsets = [5, 0], sizes = [1, 32], strides = [1, 1]} : vector<8x32xf32> to vector<1x32xf32>
    %123 = vector.extract_strided_slice %6 {offsets = [6, 0], sizes = [1, 32], strides = [1, 1]} : vector<8x32xf32> to vector<1x32xf32>
    %cst_43 = arith.constant dense<0.000000e+00> : vector<16xf32>
    %124 = vector.multi_reduction <add>, %121, %cst_43 [1] : vector<16x32xf32> to vector<16xf32>
    %125 = vector.shape_cast %124 : vector<16xf32> to vector<16x1xf32>
    %cst_44 = arith.constant 3.200000e+01 : f32
    %126 = vector.broadcast %cst_44 : f32 to vector<16x1xf32>
    %127 = arith.divf %125, %126 : vector<16x1xf32>
    %128 = vector.broadcast %127 : vector<16x1xf32> to vector<16x32xf32>
    %129 = arith.subf %121, %128 : vector<16x32xf32>
    %130 = arith.mulf %129, %129 : vector<16x32xf32>
    %cst_45 = arith.constant dense<0.000000e+00> : vector<16xf32>
    %131 = vector.multi_reduction <add>, %130, %cst_45 [1] : vector<16x32xf32> to vector<16xf32>
    %132 = vector.shape_cast %131 : vector<16xf32> to vector<16x1xf32>
    %cst_46 = arith.constant 3.200000e+01 : f32
    %133 = vector.broadcast %cst_46 : f32 to vector<16x1xf32>
    %134 = arith.divf %132, %133 : vector<16x1xf32>
    %135 = vector.broadcast %127 : vector<16x1xf32> to vector<16x32xf32>
    %136 = arith.subf %121, %135 : vector<16x32xf32>
    %cst_47 = arith.constant 9.99999974E-6 : f32
    %137 = vector.broadcast %cst_47 : f32 to vector<16x1xf32>
    %138 = arith.addf %134, %137 : vector<16x1xf32>
    %139 = math.rsqrt %138 : vector<16x1xf32>
    %140 = vector.broadcast %139 : vector<16x1xf32> to vector<16x32xf32>
    %141 = arith.mulf %136, %140 : vector<16x32xf32>
    %142 = vector.broadcast %122 : vector<1x32xf32> to vector<16x32xf32>
    %143 = arith.mulf %141, %142 : vector<16x32xf32>
    %144 = vector.broadcast %123 : vector<1x32xf32> to vector<16x32xf32>
    %145 = arith.addf %143, %144 : vector<16x32xf32>
    %c1 = arith.constant 1 : index
    %c0_48 = arith.constant 0 : index
    %c0_49 = arith.constant 0 : index
    %146 = vector.load %arg8[%c1, %c0_48, %c0_49] : memref<2x8x32xf32, #tpu.memory_space<vmem>>, vector<1x8x32xf32>
    %147 = vector.shape_cast %146 : vector<1x8x32xf32> to vector<8x32xf32>
    %148 = arith.truncf %145 : vector<16x32xf32> to vector<16x32xbf16>
    %c1_50 = arith.constant 1 : index
    %c0_51 = arith.constant 0 : index
    %c0_52 = arith.constant 0 : index
    %149 = vector.load %arg3[%c1_50, %c0_51, %c0_52] : memref<2x32x32xbf16, #tpu.memory_space<vmem>>, vector<1x32x32xbf16>
    %150 = vector.shape_cast %149 : vector<1x32x32xbf16> to vector<32x32xbf16>
    %cst_53 = arith.constant dense<0.000000e+00> : vector<16x32xf32>
    %151 = tpu.matmul %148, %150, %cst_53 {dimension_numbers = #tpu.dot_dimension_numbers<[1], [0], [0], [1], [0, 0, 1, 1], [], []>} : vector<16x32xbf16>, vector<32x32xbf16>, vector<16x32xf32> -> vector<16x32xf32>
    %152 = vector.extract_strided_slice %147 {offsets = [0, 0], sizes = [1, 32], strides = [1, 1]} : vector<8x32xf32> to vector<1x32xf32>
    %153 = vector.broadcast %152 : vector<1x32xf32> to vector<16x32xf32>
    %154 = arith.addf %151, %153 : vector<16x32xf32>
    %c1_54 = arith.constant 1 : index
    %c0_55 = arith.constant 0 : index
    %c0_56 = arith.constant 0 : index
    %155 = vector.load %arg4[%c1_54, %c0_55, %c0_56] : memref<2x32x64xbf16, #tpu.memory_space<vmem>>, vector<1x32x64xbf16>
    %156 = vector.shape_cast %155 : vector<1x32x64xbf16> to vector<32x64xbf16>
    %cst_57 = arith.constant dense<0.000000e+00> : vector<8x64xf32>
    %157 = tpu.matmul %4, %156, %cst_57 {dimension_numbers = #tpu.dot_dimension_numbers<[1], [0], [0], [1], [0, 0, 1, 1], [], []>} : vector<8x32xbf16>, vector<32x64xbf16>, vector<8x64xf32> -> vector<8x64xf32>
    %c1_58 = arith.constant 1 : index
    %c0_59 = arith.constant 0 : index
    %c0_60 = arith.constant 0 : index
    %158 = vector.load %arg9[%c1_58, %c0_59, %c0_60] : memref<2x1x64xf32, #tpu.memory_space<vmem>>, vector<1x1x64xf32>
    %159 = vector.shape_cast %158 : vector<1x1x64xf32> to vector<1x64xf32>
    %160 = vector.broadcast %159 : vector<1x64xf32> to vector<8x64xf32>
    %161 = arith.addf %157, %160 : vector<8x64xf32>
    %162 = arith.truncf %154 : vector<16x32xf32> to vector<16x32xbf16>
    %163 = arith.truncf %161 : vector<8x64xf32> to vector<8x64xbf16>
    %164 = vector.extract_strided_slice %162 {offsets = [0, 0], sizes = [16, 8], strides = [1, 1]} : vector<16x32xbf16> to vector<16x8xbf16>
    %165 = vector.shape_cast %164 : vector<16x8xbf16> to vector<1x16x8xbf16>
    %166 = vector.extract_strided_slice %162 {offsets = [0, 8], sizes = [16, 8], strides = [1, 1]} : vector<16x32xbf16> to vector<16x8xbf16>
    %167 = vector.shape_cast %166 : vector<16x8xbf16> to vector<1x16x8xbf16>
    %168 = vector.extract_strided_slice %162 {offsets = [0, 16], sizes = [16, 8], strides = [1, 1]} : vector<16x32xbf16> to vector<16x8xbf16>
    %169 = vector.shape_cast %168 : vector<16x8xbf16> to vector<1x16x8xbf16>
    %170 = vector.extract_strided_slice %162 {offsets = [0, 24], sizes = [16, 8], strides = [1, 1]} : vector<16x32xbf16> to vector<16x8xbf16>
    %171 = vector.shape_cast %170 : vector<16x8xbf16> to vector<1x16x8xbf16>
    %172 = tpu.concatenate %165, %167, %169, %171 in 0 : vector<1x16x8xbf16>, vector<1x16x8xbf16>, vector<1x16x8xbf16>, vector<1x16x8xbf16> -> vector<4x16x8xbf16>
    %173 = vector.extract_strided_slice %163 {offsets = [0, 0], sizes = [8, 8], strides = [1, 1]} : vector<8x64xbf16> to vector<8x8xbf16>
    %174 = vector.shape_cast %173 : vector<8x8xbf16> to vector<1x8x8xbf16>
    %175 = vector.extract_strided_slice %163 {offsets = [0, 8], sizes = [8, 8], strides = [1, 1]} : vector<8x64xbf16> to vector<8x8xbf16>
    %176 = vector.shape_cast %175 : vector<8x8xbf16> to vector<1x8x8xbf16>
    %177 = vector.extract_strided_slice %163 {offsets = [0, 16], sizes = [8, 8], strides = [1, 1]} : vector<8x64xbf16> to vector<8x8xbf16>
    %178 = vector.shape_cast %177 : vector<8x8xbf16> to vector<1x8x8xbf16>
    %179 = vector.extract_strided_slice %163 {offsets = [0, 24], sizes = [8, 8], strides = [1, 1]} : vector<8x64xbf16> to vector<8x8xbf16>
    %180 = vector.shape_cast %179 : vector<8x8xbf16> to vector<1x8x8xbf16>
    %181 = tpu.concatenate %174, %176, %178, %180 in 0 : vector<1x8x8xbf16>, vector<1x8x8xbf16>, vector<1x8x8xbf16>, vector<1x8x8xbf16> -> vector<4x8x8xbf16>
    %182 = vector.extract_strided_slice %163 {offsets = [0, 32], sizes = [8, 8], strides = [1, 1]} : vector<8x64xbf16> to vector<8x8xbf16>
    %183 = vector.shape_cast %182 : vector<8x8xbf16> to vector<1x8x8xbf16>
    %184 = vector.extract_strided_slice %163 {offsets = [0, 40], sizes = [8, 8], strides = [1, 1]} : vector<8x64xbf16> to vector<8x8xbf16>
    %185 = vector.shape_cast %184 : vector<8x8xbf16> to vector<1x8x8xbf16>
    %186 = vector.extract_strided_slice %163 {offsets = [0, 48], sizes = [8, 8], strides = [1, 1]} : vector<8x64xbf16> to vector<8x8xbf16>
    %187 = vector.shape_cast %186 : vector<8x8xbf16> to vector<1x8x8xbf16>
    %188 = vector.extract_strided_slice %163 {offsets = [0, 56], sizes = [8, 8], strides = [1, 1]} : vector<8x64xbf16> to vector<8x8xbf16>
    %189 = vector.shape_cast %188 : vector<8x8xbf16> to vector<1x8x8xbf16>
    %190 = tpu.concatenate %183, %185, %187, %189 in 0 : vector<1x8x8xbf16>, vector<1x8x8xbf16>, vector<1x8x8xbf16>, vector<1x8x8xbf16> -> vector<4x8x8xbf16>
    "tpu.trace_start"() <{level = 10 : i32, message = "hsd,htd->hst"}> : () -> ()
    %cst_61 = arith.constant dense<0.000000e+00> : vector<4x16x8xf32>
    %191 = tpu.matmul %172, %181, %cst_61 {dimension_numbers = #tpu.dot_dimension_numbers<[2], [2], [1], [1], [0, 0, 0, 1, 1, 1], [0], [0]>} : vector<4x16x8xbf16>, vector<4x8x8xbf16>, vector<4x16x8xf32> -> vector<4x16x8xf32>
    "tpu.trace_stop"() : () -> ()
    %cst_62 = arith.constant dense<0xFF800000> : vector<4x16xf32>
    %192 = vector.multi_reduction <maximumf>, %191, %cst_62 [2] : vector<4x16x8xf32> to vector<4x16xf32>
    %193 = vector.shape_cast %192 : vector<4x16xf32> to vector<4x16x1xf32>
    %194 = vector.broadcast %193 : vector<4x16x1xf32> to vector<4x16x8xf32>
    %195 = arith.subf %191, %194 : vector<4x16x8xf32>
    %196 = math.exp %195 : vector<4x16x8xf32>
    %cst_63 = arith.constant dense<0.000000e+00> : vector<4x16xf32>
    %197 = vector.multi_reduction <add>, %196, %cst_63 [2] : vector<4x16x8xf32> to vector<4x16xf32>
    %198 = vector.shape_cast %197 : vector<4x16xf32> to vector<4x16x1xf32>
    %199 = tpu.reciprocal %198 {approx = true} : vector<4x16x1xf32> -> vector<4x16x1xf32>
    %200 = vector.broadcast %199 : vector<4x16x1xf32> to vector<4x16x8xf32>
    %201 = arith.mulf %196, %200 : vector<4x16x8xf32>
    %202 = arith.truncf %201 : vector<4x16x8xf32> to vector<4x16x8xbf16>
    "tpu.trace_start"() <{level = 10 : i32, message = "hst,htd->hsd"}> : () -> ()
    %cst_64 = arith.constant dense<0.000000e+00> : vector<4x16x8xf32>
    %203 = tpu.matmul %202, %190, %cst_64 {dimension_numbers = #tpu.dot_dimension_numbers<[2], [1], [1], [2], [0, 0, 0, 1, 1, 2], [0], [0]>} : vector<4x16x8xbf16>, vector<4x8x8xbf16>, vector<4x16x8xf32> -> vector<4x16x8xf32>
    "tpu.trace_stop"() : () -> ()
    %204 = vector.extract_strided_slice %203 {offsets = [0, 0, 0], sizes = [1, 16, 8], strides = [1, 1, 1]} : vector<4x16x8xf32> to vector<1x16x8xf32>
    %205 = vector.shape_cast %204 : vector<1x16x8xf32> to vector<16x8xf32>
    %206 = vector.extract_strided_slice %203 {offsets = [1, 0, 0], sizes = [1, 16, 8], strides = [1, 1, 1]} : vector<4x16x8xf32> to vector<1x16x8xf32>
    %207 = vector.shape_cast %206 : vector<1x16x8xf32> to vector<16x8xf32>
    %208 = vector.extract_strided_slice %203 {offsets = [2, 0, 0], sizes = [1, 16, 8], strides = [1, 1, 1]} : vector<4x16x8xf32> to vector<1x16x8xf32>
    %209 = vector.shape_cast %208 : vector<1x16x8xf32> to vector<16x8xf32>
    %210 = vector.extract_strided_slice %203 {offsets = [3, 0, 0], sizes = [1, 16, 8], strides = [1, 1, 1]} : vector<4x16x8xf32> to vector<1x16x8xf32>
    %211 = vector.shape_cast %210 : vector<1x16x8xf32> to vector<16x8xf32>
    %212 = tpu.concatenate %205, %207, %209, %211 in 1 : vector<16x8xf32>, vector<16x8xf32>, vector<16x8xf32>, vector<16x8xf32> -> vector<16x32xf32>
    %213 = arith.truncf %212 : vector<16x32xf32> to vector<16x32xbf16>
    %c1_65 = arith.constant 1 : index
    %c0_66 = arith.constant 0 : index
    %c0_67 = arith.constant 0 : index
    %214 = vector.load %arg5[%c1_65, %c0_66, %c0_67] : memref<2x32x32xbf16, #tpu.memory_space<vmem>>, vector<1x32x32xbf16>
    %215 = vector.shape_cast %214 : vector<1x32x32xbf16> to vector<32x32xbf16>
    %cst_68 = arith.constant dense<0.000000e+00> : vector<16x32xf32>
    %216 = tpu.matmul %213, %215, %cst_68 {dimension_numbers = #tpu.dot_dimension_numbers<[1], [0], [0], [1], [0, 0, 1, 1], [], []>} : vector<16x32xbf16>, vector<32x32xbf16>, vector<16x32xf32> -> vector<16x32xf32>
    %217 = vector.extract_strided_slice %147 {offsets = [1, 0], sizes = [1, 32], strides = [1, 1]} : vector<8x32xf32> to vector<1x32xf32>
    %218 = vector.broadcast %217 : vector<1x32xf32> to vector<16x32xf32>
    %219 = arith.addf %216, %218 : vector<16x32xf32>
    %220 = arith.addf %145, %219 : vector<16x32xf32>
    %221 = vector.extract_strided_slice %147 {offsets = [2, 0], sizes = [1, 32], strides = [1, 1]} : vector<8x32xf32> to vector<1x32xf32>
    %222 = vector.extract_strided_slice %147 {offsets = [3, 0], sizes = [1, 32], strides = [1, 1]} : vector<8x32xf32> to vector<1x32xf32>
    %cst_69 = arith.constant dense<0.000000e+00> : vector<16xf32>
    %223 = vector.multi_reduction <add>, %220, %cst_69 [1] : vector<16x32xf32> to vector<16xf32>
    %224 = vector.shape_cast %223 : vector<16xf32> to vector<16x1xf32>
    %cst_70 = arith.constant 3.200000e+01 : f32
    %225 = vector.broadcast %cst_70 : f32 to vector<16x1xf32>
    %226 = arith.divf %224, %225 : vector<16x1xf32>
    %227 = vector.broadcast %226 : vector<16x1xf32> to vector<16x32xf32>
    %228 = arith.subf %220, %227 : vector<16x32xf32>
    %229 = arith.mulf %228, %228 : vector<16x32xf32>
    %cst_71 = arith.constant dense<0.000000e+00> : vector<16xf32>
    %230 = vector.multi_reduction <add>, %229, %cst_71 [1] : vector<16x32xf32> to vector<16xf32>
    %231 = vector.shape_cast %230 : vector<16xf32> to vector<16x1xf32>
    %cst_72 = arith.constant 3.200000e+01 : f32
    %232 = vector.broadcast %cst_72 : f32 to vector<16x1xf32>
    %233 = arith.divf %231, %232 : vector<16x1xf32>
    %234 = vector.broadcast %226 : vector<16x1xf32> to vector<16x32xf32>
    %235 = arith.subf %220, %234 : vector<16x32xf32>
    %cst_73 = arith.constant 9.99999974E-6 : f32
    %236 = vector.broadcast %cst_73 : f32 to vector<16x1xf32>
    %237 = arith.addf %233, %236 : vector<16x1xf32>
    %238 = math.rsqrt %237 : vector<16x1xf32>
    %239 = vector.broadcast %238 : vector<16x1xf32> to vector<16x32xf32>
    %240 = arith.mulf %235, %239 : vector<16x32xf32>
    %241 = vector.broadcast %221 : vector<1x32xf32> to vector<16x32xf32>
    %242 = arith.mulf %240, %241 : vector<16x32xf32>
    %243 = vector.broadcast %222 : vector<1x32xf32> to vector<16x32xf32>
    %244 = arith.addf %242, %243 : vector<16x32xf32>
    %245 = arith.truncf %244 : vector<16x32xf32> to vector<16x32xbf16>
    %c1_74 = arith.constant 1 : index
    %c0_75 = arith.constant 0 : index
    %c0_76 = arith.constant 0 : index
    %246 = vector.load %arg6[%c1_74, %c0_75, %c0_76] : memref<2x32x64xbf16, #tpu.memory_space<vmem>>, vector<1x32x64xbf16>
    %247 = vector.shape_cast %246 : vector<1x32x64xbf16> to vector<32x64xbf16>
    %cst_77 = arith.constant dense<0.000000e+00> : vector<16x64xf32>
    %248 = tpu.matmul %245, %247, %cst_77 {dimension_numbers = #tpu.dot_dimension_numbers<[1], [0], [0], [1], [0, 0, 1, 1], [], []>} : vector<16x32xbf16>, vector<32x64xbf16>, vector<16x64xf32> -> vector<16x64xf32>
    %c1_78 = arith.constant 1 : index
    %c0_79 = arith.constant 0 : index
    %c0_80 = arith.constant 0 : index
    %249 = vector.load %arg10[%c1_78, %c0_79, %c0_80] : memref<2x1x64xf32, #tpu.memory_space<vmem>>, vector<1x1x64xf32>
    %250 = vector.shape_cast %249 : vector<1x1x64xf32> to vector<1x64xf32>
    %251 = vector.broadcast %250 : vector<1x64xf32> to vector<16x64xf32>
    %252 = arith.addf %248, %251 : vector<16x64xf32>
    %cst_81 = arith.constant 0.000000e+00 : f32
    %253 = vector.broadcast %cst_81 : f32 to vector<16x64xf32>
    %254 = arith.maximumf %252, %253 : vector<16x64xf32>
    %255 = arith.truncf %254 : vector<16x64xf32> to vector<16x64xbf16>
    %c1_82 = arith.constant 1 : index
    %c0_83 = arith.constant 0 : index
    %c0_84 = arith.constant 0 : index
    %256 = vector.load %arg7[%c1_82, %c0_83, %c0_84] : memref<2x64x32xbf16, #tpu.memory_space<vmem>>, vector<1x64x32xbf16>
    %257 = vector.shape_cast %256 : vector<1x64x32xbf16> to vector<64x32xbf16>
    %cst_85 = arith.constant dense<0.000000e+00> : vector<16x32xf32>
    %258 = tpu.matmul %255, %257, %cst_85 {dimension_numbers = #tpu.dot_dimension_numbers<[1], [0], [0], [1], [0, 0, 1, 1], [], []>} : vector<16x64xbf16>, vector<64x32xbf16>, vector<16x32xf32> -> vector<16x32xf32>
    %259 = vector.extract_strided_slice %147 {offsets = [4, 0], sizes = [1, 32], strides = [1, 1]} : vector<8x32xf32> to vector<1x32xf32>
    %260 = vector.broadcast %259 : vector<1x32xf32> to vector<16x32xf32>
    %261 = arith.addf %258, %260 : vector<16x32xf32>
    %262 = arith.addf %244, %261 : vector<16x32xf32>
    %263 = vector.extract_strided_slice %147 {offsets = [5, 0], sizes = [1, 32], strides = [1, 1]} : vector<8x32xf32> to vector<1x32xf32>
    %264 = vector.extract_strided_slice %147 {offsets = [6, 0], sizes = [1, 32], strides = [1, 1]} : vector<8x32xf32> to vector<1x32xf32>
    %cst_86 = arith.constant dense<0.000000e+00> : vector<16xf32>
    %265 = vector.multi_reduction <add>, %262, %cst_86 [1] : vector<16x32xf32> to vector<16xf32>
    %266 = vector.shape_cast %265 : vector<16xf32> to vector<16x1xf32>
    %cst_87 = arith.constant 3.200000e+01 : f32
    %267 = vector.broadcast %cst_87 : f32 to vector<16x1xf32>
    %268 = arith.divf %266, %267 : vector<16x1xf32>
    %269 = vector.broadcast %268 : vector<16x1xf32> to vector<16x32xf32>
    %270 = arith.subf %262, %269 : vector<16x32xf32>
    %271 = arith.mulf %270, %270 : vector<16x32xf32>
    %cst_88 = arith.constant dense<0.000000e+00> : vector<16xf32>
    %272 = vector.multi_reduction <add>, %271, %cst_88 [1] : vector<16x32xf32> to vector<16xf32>
    %273 = vector.shape_cast %272 : vector<16xf32> to vector<16x1xf32>
    %cst_89 = arith.constant 3.200000e+01 : f32
    %274 = vector.broadcast %cst_89 : f32 to vector<16x1xf32>
    %275 = arith.divf %273, %274 : vector<16x1xf32>
    %276 = vector.broadcast %268 : vector<16x1xf32> to vector<16x32xf32>
    %277 = arith.subf %262, %276 : vector<16x32xf32>
    %cst_90 = arith.constant 9.99999974E-6 : f32
    %278 = vector.broadcast %cst_90 : f32 to vector<16x1xf32>
    %279 = arith.addf %275, %278 : vector<16x1xf32>
    %280 = math.rsqrt %279 : vector<16x1xf32>
    %281 = vector.broadcast %280 : vector<16x1xf32> to vector<16x32xf32>
    %282 = arith.mulf %277, %281 : vector<16x32xf32>
    %283 = vector.broadcast %263 : vector<1x32xf32> to vector<16x32xf32>
    %284 = arith.mulf %282, %283 : vector<16x32xf32>
    %285 = vector.broadcast %264 : vector<1x32xf32> to vector<16x32xf32>
    %286 = arith.addf %284, %285 : vector<16x32xf32>
    %c0_91 = arith.constant 0 : index
    %c0_92 = arith.constant 0 : index
    %c0_93 = arith.constant 0 : index
    %287 = vector.load %arg11[%c0_91, %c0_92, %c0_93] : memref<1x16x32xf32, #tpu.memory_space<vmem>>, vector<1x16x32xf32>
    %288 = vector.shape_cast %287 : vector<1x16x32xf32> to vector<16x32xf32>
    %289 = vector.shape_cast %286 : vector<16x32xf32> to vector<1x16x32xf32>
    tpu.vector_store %arg11[%c0_91, %c0_92, %c0_93], %289 {strides = array<i32>} : memref<1x16x32xf32, #tpu.memory_space<vmem>>, vector<1x16x32xf32>,
    return
  }
  func.func @transform_0(%arg0: i32) -> (i32, i32, i32) {
    %c0_i32 = arith.constant 0 : i32
    %c0_i32_0 = arith.constant 0 : i32
    %c0_i32_1 = arith.constant 0 : i32
    return %arg0, %c0_i32, %c0_i32_0 : i32, i32, i32
  }
  func.func @transform_1(%arg0: i32) -> (i32, i32, i32) {
    %c0_i32 = arith.constant 0 : i32
    %c0_i32_0 = arith.constant 0 : i32
    %c0_i32_1 = arith.constant 0 : i32
    return %arg0, %c0_i32, %c0_i32_0 : i32, i32, i32
  }
  func.func @transform_2(%arg0: i32) -> (i32, i32, i32) {
    %c0_i32 = arith.constant 0 : i32
    %c0_i32_0 = arith.constant 0 : i32
    %c0_i32_1 = arith.constant 0 : i32
    %c0_i32_2 = arith.constant 0 : i32
    return %c0_i32, %c0_i32_0, %c0_i32_1 : i32, i32, i32
  }
  func.func @transform_3(%arg0: i32) -> (i32, i32, i32) {
    %c0_i32 = arith.constant 0 : i32
    %c0_i32_0 = arith.constant 0 : i32
    %c0_i32_1 = arith.constant 0 : i32
    %c0_i32_2 = arith.constant 0 : i32
    return %c0_i32, %c0_i32_0, %c0_i32_1 : i32, i32, i32
  }
  func.func @transform_4(%arg0: i32) -> (i32, i32, i32) {
    %c0_i32 = arith.constant 0 : i32
    %c0_i32_0 = arith.constant 0 : i32
    %c0_i32_1 = arith.constant 0 : i32
    %c0_i32_2 = arith.constant 0 : i32
    return %c0_i32, %c0_i32_0, %c0_i32_1 : i32, i32, i32
  }
  func.func @transform_5(%arg0: i32) -> (i32, i32, i32) {
    %c0_i32 = arith.constant 0 : i32
    %c0_i32_0 = arith.constant 0 : i32
    %c0_i32_1 = arith.constant 0 : i32
    %c0_i32_2 = arith.constant 0 : i32
    return %c0_i32, %c0_i32_0, %c0_i32_1 : i32, i32, i32
  }
  func.func @transform_6(%arg0: i32) -> (i32, i32, i32) {
    %c0_i32 = arith.constant 0 : i32
    %c0_i32_0 = arith.constant 0 : i32
    %c0_i32_1 = arith.constant 0 : i32
    %c0_i32_2 = arith.constant 0 : i32
    return %c0_i32, %c0_i32_0, %c0_i32_1 : i32, i32, i32
  }
  func.func @transform_7(%arg0: i32) -> (i32, i32, i32) {
    %c0_i32 = arith.constant 0 : i32
    %c0_i32_0 = arith.constant 0 : i32
    %c0_i32_1 = arith.constant 0 : i32
    %c0_i32_2 = arith.constant 0 : i32
    return %c0_i32, %c0_i32_0, %c0_i32_1 : i32, i32, i32
  }
  func.func @transform_8(%arg0: i32) -> (i32, i32, i32) {
    %c0_i32 = arith.constant 0 : i32
    %c0_i32_0 = arith.constant 0 : i32
    %c0_i32_1 = arith.constant 0 : i32
    %c0_i32_2 = arith.constant 0 : i32
    return %c0_i32, %c0_i32_0, %c0_i32_1 : i32, i32, i32
  }
  func.func @transform_9(%arg0: i32) -> (i32, i32, i32) {
    %c0_i32 = arith.constant 0 : i32
    %c0_i32_0 = arith.constant 0 : i32
    %c0_i32_1 = arith.constant 0 : i32
    %c0_i32_2 = arith.constant 0 : i32
    return %c0_i32, %c0_i32_0, %c0_i32_1 : i32, i32, i32
  }
  func.func @transform_10(%arg0: i32) -> (i32, i32, i32) {
    %c0_i32 = arith.constant 0 : i32
    %c0_i32_0 = arith.constant 0 : i32
    %c0_i32_1 = arith.constant 0 : i32
    return %arg0, %c0_i32, %c0_i32_0 : i32, i32, i32
  }
}

</mosaic_0001>

<llo_original>
// kernel: bottleneck_forward.1
$region0: #{bottleneck_forward.1}
  #allocation0 [shape = 'u32[]', space=smem, size = 0x4, offset = 0x4, fixed_abs, tag = 'smem constant byte address 0x4 - core index']
  #allocation1 [shape = 'u32[72,128]{1,0:T(1,128)}', space=vmem, size = 0x9000, scoped, tag = 'internal scratch']
  %s0 = inlined_call_operand.vmem [shape: f32[2,16,32], index: 0, kind: input, shape index: {}, may-alias: {0,10}]
  %s1 = inlined_call_operand.vmem [shape: f32[2,8,32], index: 1, kind: input, shape index: {}]
  %s2 = inlined_call_operand.vmem [shape: bf16[2,32,32], index: 2, kind: input, shape index: {}]
  %s3 = inlined_call_operand.vmem [shape: bf16[2,32,64], index: 3, kind: input, shape index: {}]
  %s4 = inlined_call_operand.vmem [shape: bf16[2,32,32], index: 4, kind: input, shape index: {}]
  %s5 = inlined_call_operand.hbm [shape: bf16[2,32,64], index: 5, kind: input, shape index: {}]
  %s6 = inlined_call_operand.vmem [shape: bf16[2,64,32], index: 6, kind: input, shape index: {}]
  %s7 = inlined_call_operand.vmem [shape: f32[2,8,32], index: 7, kind: input, shape index: {}]
  %s8 = inlined_call_operand.vmem [shape: f32[2,1,64], index: 8, kind: input, shape index: {}]
  %s9 = inlined_call_operand.hbm [shape: f32[2,1,64], index: 9, kind: input, shape index: {}]
  %s10 = inlined_call_operand.vmem [shape: f32[2,16,32], index: 10, kind: output, shape index: {}, may-alias: {0,10}]
  %s11 = sld [smem:[#allocation0]]
  $region81: #{bottleneck_forward.1} parent=0
    _
  %s13 = ssub.s32 1, %s11
  %s14 = scalar_select 0, %s13, %s11
  $region1: #{bottleneck_forward.1} parent=0
    #allocation2 [shape = 'u8[16384]{0}', space=vmem, size = 0x4000, scoped, tag = 'input window, operand 5, single buffered']
    #allocation3 [shape = 's32[2]{0}', space=sflag, size = 0x8, scoped, tag = 'scoped memory for bottleneck_forward.1']
    #allocation4 [shape = 'u8[1024]{0}', space=vmem, size = 0x400, scoped, tag = 'input window, operand 9, single buffered']
    #allocation5 [shape = 's32[1]{0}', space=sflag, size = 0x4, scoped, tag = 'scoped memory for bottleneck_forward.1']
    %15 = vsyncpa [#allocation3], 0
    %16 = vsyncpa [#allocation5], 0
    loop: start=0, step=1, limit=4
    $region2: #{bottleneck_forward.1} parent=1 // loop_pre_header
      _
    $region3: #{bottleneck_forward.1} parent=1 // loop_header
      %s18 = sphi 0, %s22
      %p19 = scmp.ge.s32.totalorder %s18, 4
      %s28 = sphi 0, %s30
      %s31 = sphi 0, %s28
      %s32 = sphi 0, %s31
      %s48 = sphi 0, %s32
      %s54 = sphi 0, %s56
      %s57 = sphi 0, %s54
      %s58 = sphi 0, %s57
      %s74 = sphi 0, %s58
      %s78 = sphi 0, %s78
      %s80 = sphi 0, %s78
      %s81 = sphi 0, %s80
      %s95 = sphi 0, %s81
      %s99 = sphi 0, %s99
      %s101 = sphi 0, %s99
      %s102 = sphi 0, %s101
      %s116 = sphi 0, %s102
      %s120 = sphi 0, %s120
      %s122 = sphi 0, %s120
      %s123 = sphi 0, %s122
      %s137 = sphi 0, %s123
      %s141 = sphi 0, %s141
      %s143 = sphi 0, %s141
      %s144 = sphi 0, %s143
      %s158 = sphi 0, %s144
      %s162 = sphi 0, %s162
      %s164 = sphi 0, %s162
      %s165 = sphi 0, %s164
      %s179 = sphi 0, %s165
      %s183 = sphi 0, %s183
      %s185 = sphi 0, %s183
      %s186 = sphi 0, %s185
      %s200 = sphi 0, %s186
      %s204 = sphi 0, %s204
      %s206 = sphi 0, %s204
      %s207 = sphi 0, %s206
      %s221 = sphi 0, %s207
      %s225 = sphi 0, %s225
      %s227 = sphi 0, %s225
      %s228 = sphi 0, %s227
      %s242 = sphi 0, %s228
      %s248 = sphi 0, %s250
      %s251 = sphi 0, %s248
      %s252 = sphi 0, %s251
      %s268 = sphi 0, %s252
    $region4: #{bottleneck_forward.1} parent=1 // loop_header_branch
      %21 = sbr.rel (%p19) target = $region8
    $region5: #{bottleneck_forward.1} parent=1 // loop_body
      %s23 = ssub.s32 %s18, 1
      %s24 = ssub.s32 %s18, 2
      %s25 = sadd.s32 %s18, 1
      %s26 = ssub.s32 %s18, %s25
      %p27 = scmp.eq.s32.totalorder %s26, 0
      %s29 = sadd.s32 %s28, 1
      %s30 = scalar_select %p27, %s28, %s29
      %p33 = pneg %p27
      %p34 = scmp.eq.s32.totalorder %s18, 1
      %p35 = por %p33, %p34
      %p36 = scmp.ne.s32.totalorder %s28, %s31
      %p37 = scmp.eq.s32.totalorder %s18, 0
      %p38 = por %p36, %p37
      %p39 = scmp.ne.s32.totalorder %s28, %s31
      %p40 = scmp.eq.s32.totalorder %s23, 1
      %p41 = por %p39, %p40
      %p42 = scmp.ne.s32.totalorder %s31, %s32
      %p43 = scmp.eq.s32.totalorder %s23, 0
      %p44 = por %p42, %p43
      %p45 = scmp.ne.s32.totalorder %s31, %s32
      %p46 = scmp.eq.s32.totalorder %s24, 1
      %p47 = por %p45, %p46
      %p49 = scmp.ne.s32.totalorder %s32, %s48
      %p50 = scmp.eq.s32.totalorder %s24, 0
      %p51 = por %p49, %p50
      %s52 = ssub.s32 %s18, %s25
      %p53 = scmp.eq.s32.totalorder %s52, 0
      %s55 = sadd.s32 %s54, 1
      %s56 = scalar_select %p53, %s54, %s55
      %p59 = pneg %p53
      %p60 = scmp.eq.s32.totalorder %s18, 1
      %p61 = por %p59, %p60
      %p62 = scmp.ne.s32.totalorder %s54, %s57
      %p63 = scmp.eq.s32.totalorder %s18, 0
      %p64 = por %p62, %p63
      %p65 = scmp.ne.s32.totalorder %s54, %s57
      %p66 = scmp.eq.s32.totalorder %s23, 1
      %p67 = por %p65, %p66
      %p68 = scmp.ne.s32.totalorder %s57, %s58
      %p69 = scmp.eq.s32.totalorder %s23, 0
      %p70 = por %p68, %p69
      %p71 = scmp.ne.s32.totalorder %s57, %s58
      %p72 = scmp.eq.s32.totalorder %s24, 1
      %p73 = por %p71, %p72
      %p75 = scmp.ne.s32.totalorder %s58, %s74
      %p76 = scmp.eq.s32.totalorder %s24, 0
      %p77 = por %p75, %p76
      %s79 = sadd.s32 %s78, 1
      %p82 = scmp.eq.s32.totalorder %s18, 1
      %p83 = scmp.ne.s32.totalorder %s78, %s80
      %p84 = scmp.eq.s32.totalorder %s18, 0
      %p85 = por %p83, %p84
      %p86 = scmp.ne.s32.totalorder %s78, %s80
      %p87 = scmp.eq.s32.totalorder %s23, 1
      %p88 = por %p86, %p87
      %p89 = scmp.ne.s32.totalorder %s80, %s81
      %p90 = scmp.eq.s32.totalorder %s23, 0
      %p91 = por %p89, %p90
      %p92 = scmp.ne.s32.totalorder %s80, %s81
      %p93 = scmp.eq.s32.totalorder %s24, 1
      %p94 = por %p92, %p93
      %p96 = scmp.ne.s32.totalorder %s81, %s95
      %p97 = scmp.eq.s32.totalorder %s24, 0
      %p98 = por %p96, %p97
      %s100 = sadd.s32 %s99, 1
      %p103 = scmp.eq.s32.totalorder %s18, 1
      %p104 = scmp.ne.s32.totalorder %s99, %s101
      %p105 = scmp.eq.s32.totalorder %s18, 0
      %p106 = por %p104, %p105
      %p107 = scmp.ne.s32.totalorder %s99, %s101
      %p108 = scmp.eq.s32.totalorder %s23, 1
      %p109 = por %p107, %p108
      %p110 = scmp.ne.s32.totalorder %s101, %s102
      %p111 = scmp.eq.s32.totalorder %s23, 0
      %p112 = por %p110, %p111
      %p113 = scmp.ne.s32.totalorder %s101, %s102
      %p114 = scmp.eq.s32.totalorder %s24, 1
      %p115 = por %p113, %p114
      %p117 = scmp.ne.s32.totalorder %s102, %s116
      %p118 = scmp.eq.s32.totalorder %s24, 0
      %p119 = por %p117, %p118
      %s121 = sadd.s32 %s120, 1
      %p124 = scmp.eq.s32.totalorder %s18, 1
      %p125 = scmp.ne.s32.totalorder %s120, %s122
      %p126 = scmp.eq.s32.totalorder %s18, 0
      %p127 = por %p125, %p126
      %p128 = scmp.ne.s32.totalorder %s120, %s122
      %p129 = scmp.eq.s32.totalorder %s23, 1
      %p130 = por %p128, %p129
      %p131 = scmp.ne.s32.totalorder %s122, %s123
      %p132 = scmp.eq.s32.totalorder %s23, 0
      %p133 = por %p131, %p132
      %p134 = scmp.ne.s32.totalorder %s122, %s123
      %p135 = scmp.eq.s32.totalorder %s24, 1
      %p136 = por %p134, %p135
      %p138 = scmp.ne.s32.totalorder %s123, %s137
      %p139 = scmp.eq.s32.totalorder %s24, 0
      %p140 = por %p138, %p139
      %s142 = sadd.s32 %s141, 1
      %p145 = scmp.eq.s32.totalorder %s18, 1
      %p146 = scmp.ne.s32.totalorder %s141, %s143
      %p147 = scmp.eq.s32.totalorder %s18, 0
      %p148 = por %p146, %p147
      %p149 = scmp.ne.s32.totalorder %s141, %s143
      %p150 = scmp.eq.s32.totalorder %s23, 1
      %p151 = por %p149, %p150
      %p152 = scmp.ne.s32.totalorder %s143, %s144
      %p153 = scmp.eq.s32.totalorder %s23, 0
      %p154 = por %p152, %p153
      %p155 = scmp.ne.s32.totalorder %s143, %s144
      %p156 = scmp.eq.s32.totalorder %s24, 1
      %p157 = por %p155, %p156
      %p159 = scmp.ne.s32.totalorder %s144, %s158
      %p160 = scmp.eq.s32.totalorder %s24, 0
      %p161 = por %p159, %p160
      %s163 = sadd.s32 %s162, 1
      %p166 = scmp.eq.s32.totalorder %s18, 1
      %p167 = scmp.ne.s32.totalorder %s162, %s164
      %p168 = scmp.eq.s32.totalorder %s18, 0
      %p169 = por %p167, %p168
      %p170 = scmp.ne.s32.totalorder %s162, %s164
      %p171 = scmp.eq.s32.totalorder %s23, 1
      %p172 = por %p170, %p171
      %p173 = scmp.ne.s32.totalorder %s164, %s165
      %p174 = scmp.eq.s32.totalorder %s23, 0
      %p175 = por %p173, %p174
      %p176 = scmp.ne.s32.totalorder %s164, %s165
      %p177 = scmp.eq.s32.totalorder %s24, 1
      %p178 = por %p176, %p177
      %p180 = scmp.ne.s32.totalorder %s165, %s179
      %p181 = scmp.eq.s32.totalorder %s24, 0
      %p182 = por %p180, %p181
      %s184 = sadd.s32 %s183, 1
      %p187 = scmp.eq.s32.totalorder %s18, 1
      %p188 = scmp.ne.s32.totalorder %s183, %s185
      %p189 = scmp.eq.s32.totalorder %s18, 0
      %p190 = por %p188, %p189
      %p191 = scmp.ne.s32.totalorder %s183, %s185
      %p192 = scmp.eq.s32.totalorder %s23, 1
      %p193 = por %p191, %p192
      %p194 = scmp.ne.s32.totalorder %s185, %s186
      %p195 = scmp.eq.s32.totalorder %s23, 0
      %p196 = por %p194, %p195
      %p197 = scmp.ne.s32.totalorder %s185, %s186
      %p198 = scmp.eq.s32.totalorder %s24, 1
      %p199 = por %p197, %p198
      %p201 = scmp.ne.s32.totalorder %s186, %s200
      %p202 = scmp.eq.s32.totalorder %s24, 0
      %p203 = por %p201, %p202
      %s205 = sadd.s32 %s204, 1
      %p208 = scmp.eq.s32.totalorder %s18, 1
      %p209 = scmp.ne.s32.totalorder %s204, %s206
      %p210 = scmp.eq.s32.totalorder %s18, 0
      %p211 = por %p209, %p210
      %p212 = scmp.ne.s32.totalorder %s204, %s206
      %p213 = scmp.eq.s32.totalorder %s23, 1
      %p214 = por %p212, %p213
      %p215 = scmp.ne.s32.totalorder %s206, %s207
      %p216 = scmp.eq.s32.totalorder %s23, 0
      %p217 = por %p215, %p216
      %p218 = scmp.ne.s32.totalorder %s206, %s207
      %p219 = scmp.eq.s32.totalorder %s24, 1
      %p220 = por %p218, %p219
      %p222 = scmp.ne.s32.totalorder %s207, %s221
      %p223 = scmp.eq.s32.totalorder %s24, 0
      %p224 = por %p222, %p223
      %s226 = sadd.s32 %s225, 1
      %p229 = scmp.eq.s32.totalorder %s18, 1
      %p230 = scmp.ne.s32.totalorder %s225, %s227
      %p231 = scmp.eq.s32.totalorder %s18, 0
      %p232 = por %p230, %p231
      %p233 = scmp.ne.s32.totalorder %s225, %s227
      %p234 = scmp.eq.s32.totalorder %s23, 1
      %p235 = por %p233, %p234
      %p236 = scmp.ne.s32.totalorder %s227, %s228
      %p237 = scmp.eq.s32.totalorder %s23, 0
      %p238 = por %p236, %p237
      %p239 = scmp.ne.s32.totalorder %s227, %s228
      %p240 = scmp.eq.s32.totalorder %s24, 1
      %p241 = por %p239, %p240
      %p243 = scmp.ne.s32.totalorder %s228, %s242
      %p244 = scmp.eq.s32.totalorder %s24, 0
      %p245 = por %p243, %p244
      %s246 = ssub.s32 %s18, %s25
      %p247 = scmp.eq.s32.totalorder %s246, 0
      %s249 = sadd.s32 %s248, 1
      %s250 = scalar_select %p247, %s248, %s249
      %p253 = pneg %p247
      %p254 = scmp.eq.s32.totalorder %s18, 1
      %p255 = por %p253, %p254
      %p256 = scmp.ne.s32.totalorder %s248, %s251
      %p257 = scmp.eq.s32.totalorder %s18, 0
      %p258 = por %p256, %p257
      %p259 = scmp.ne.s32.totalorder %s248, %s251
      %p260 = scmp.eq.s32.totalorder %s23, 1
      %p261 = por %p259, %p260
      %p262 = scmp.ne.s32.totalorder %s251, %s252
      %p263 = scmp.eq.s32.totalorder %s23, 0
      %p264 = por %p262, %p263
      %p265 = scmp.ne.s32.totalorder %s251, %s252
      %p266 = scmp.eq.s32.totalorder %s24, 1
      %p267 = por %p265, %p266
      %p269 = scmp.ne.s32.totalorder %s252, %s268
      %p270 = scmp.eq.s32.totalorder %s24, 0
      %p271 = por %p269, %p270
      %p272 = scmp.le.s32.totalorder 1, %s18
      %p273 = scmp.lt.s32.totalorder %s18, 3
      %p274 = pnand %p272, %p273
      %p275 = pneg %p274
      // Predicated region
      $region9: #{bottleneck_forward.1} parent=5 // pred_check
        _
      $region10: #{bottleneck_forward.1} parent=5 // pred_check_branch
        %277 = sbr.rel (%p274) target = $region12
      $region11: #{bottleneck_forward.1} parent=5 // pred_region
        %s278 = ssub.s32 %s18, 1
        // Predicated region
        $region13: #{bottleneck_forward.1} parent=11 // pred_check
          %p279 = pneg %p91
        $region14: #{bottleneck_forward.1} parent=11 // pred_check_branch
          %281 = sbr.rel (%p279) target = $region16
        $region15: #{bottleneck_forward.1} parent=11 // pred_region
          _
        $region16: #{bottleneck_forward.1} parent=11 // pred_fallthru
          _
        // Predicated region
        $region17: #{bottleneck_forward.1} parent=11 // pred_check
          %p282 = pneg %p112
        $region18: #{bottleneck_forward.1} parent=11 // pred_check_branch
          %284 = sbr.rel (%p282) target = $region20
        $region19: #{bottleneck_forward.1} parent=11 // pred_region
          _
        $region20: #{bottleneck_forward.1} parent=11 // pred_fallthru
          _
        // Predicated region
        $region21: #{bottleneck_forward.1} parent=11 // pred_check
          %p285 = pneg %p133
        $region22: #{bottleneck_forward.1} parent=11 // pred_check_branch
          %287 = sbr.rel (%p285) target = $region24
        $region23: #{bottleneck_forward.1} parent=11 // pred_region
          _
        $region24: #{bottleneck_forward.1} parent=11 // pred_fallthru
          _
        // Predicated region
        $region25: #{bottleneck_forward.1} parent=11 // pred_check
          %p288 = pneg %p154
        $region26: #{bottleneck_forward.1} parent=11 // pred_check_branch
          %290 = sbr.rel (%p288) target = $region28
        $region27: #{bottleneck_forward.1} parent=11 // pred_region
          %292 = vsyncadd [#allocation3], 0
          %s293 = sshll.u32 %s5, 4
          %s294 = int_to_ptr.hbm [resolvable:$true] %s293
          %s295 = sshll.u32 [#allocation2], 4
          %s296 = int_to_ptr.vmem [resolvable:$true] %s295
          %301 = dma.hbm_to_vmem [thread:$0]  %s294, 512, %s296, [#allocation3], 64, 64, 4
        $region28: #{bottleneck_forward.1} parent=11 // pred_fallthru
          _
        // Predicated region
        $region29: #{bottleneck_forward.1} parent=11 // pred_check
          %p302 = pneg %p175
        $region30: #{bottleneck_forward.1} parent=11 // pred_check_branch
          %304 = sbr.rel (%p302) target = $region32
        $region31: #{bottleneck_forward.1} parent=11 // pred_region
          _
        $region32: #{bottleneck_forward.1} parent=11 // pred_fallthru
          _
        // Predicated region
        $region33: #{bottleneck_forward.1} parent=11 // pred_check
          %p305 = pneg %p196
        $region34: #{bottleneck_forward.1} parent=11 // pred_check_branch
          %307 = sbr.rel (%p305) target = $region36
        $region35: #{bottleneck_forward.1} parent=11 // pred_region
          _
        $region36: #{bottleneck_forward.1} parent=11 // pred_fallthru
          _
        // Predicated region
        $region37: #{bottleneck_forward.1} parent=11 // pred_check
          %p308 = pneg %p217
        $region38: #{bottleneck_forward.1} parent=11 // pred_check_branch
          %310 = sbr.rel (%p308) target = $region40
        $region39: #{bottleneck_forward.1} parent=11 // pred_region
          _
        $region40: #{bottleneck_forward.1} parent=11 // pred_fallthru
          _
        // Predicated region
        $region41: #{bottleneck_forward.1} parent=11 // pred_check
          %p311 = pneg %p238
        $region42: #{bottleneck_forward.1} parent=11 // pred_check_branch
          %313 = sbr.rel (%p311) target = $region44
        $region43: #{bottleneck_forward.1} parent=11 // pred_region
          %315 = vsyncadd [#allocation5], 0
          %s316 = sshll.u32 %s9, 4
          %s317 = int_to_ptr.hbm [resolvable:$true] %s316
          %s318 = sshll.u32 [#allocation4], 4
          %s319 = int_to_ptr.vmem [resolvable:$true] %s318
          %324 = dma.hbm_to_vmem [thread:$0]  %s317, 32, %s319, [#allocation5], 16, 16, 1
        $region44: #{bottleneck_forward.1} parent=11 // pred_fallthru
          _
      $region12: #{bottleneck_forward.1} parent=5 // pred_fallthru
        _
      %p325 = scmp.lt.s32.totalorder %s18, 2
      // Predicated region
      $region45: #{bottleneck_forward.1} parent=5 // pred_check
        %p326 = pneg %p325
      $region46: #{bottleneck_forward.1} parent=5 // pred_check_branch
        %328 = sbr.rel (%p326) target = $region48
      $region47: #{bottleneck_forward.1} parent=5 // pred_region
        // Predicated region
        $region49: #{bottleneck_forward.1} parent=47 // pred_check
          %p329 = pneg %p38
        $region50: #{bottleneck_forward.1} parent=47 // pred_check_branch
          %331 = sbr.rel (%p329) target = $region52
        $region51: #{bottleneck_forward.1} parent=47 // pred_region
          %p332 = scmp.lt.s32.totalorder %s18, 1
          %s333 = scalar_select %p332, %s18, 1
          %s334 = smul.addr %s333, 2
          %s335 = smul.addr %s334, 8
          %s336 = scalar_lea.vmem %s0, %s335
        $region52: #{bottleneck_forward.1} parent=47 // pred_fallthru
          _
        // Predicated region
        $region53: #{bottleneck_forward.1} parent=47 // pred_check
          %p337 = pneg %p64
        $region54: #{bottleneck_forward.1} parent=47 // pred_check_branch
          %339 = sbr.rel (%p337) target = $region56
        $region55: #{bottleneck_forward.1} parent=47 // pred_region
          %p340 = scmp.lt.s32.totalorder %s18, 1
          %s341 = scalar_select %p340, %s18, 1
          %s342 = smul.addr %s341, 8
          %s343 = scalar_lea.vmem %s1, %s342
        $region56: #{bottleneck_forward.1} parent=47 // pred_fallthru
          _
      $region48: #{bottleneck_forward.1} parent=5 // pred_fallthru
        _
      %p344 = scmp.le.s32.totalorder 1, %s18
      %p345 = scmp.lt.s32.totalorder %s18, 3
      %p346 = pnand %p344, %p345
      %p347 = pneg %p346
      // Predicated region
      $region57: #{bottleneck_forward.1} parent=5 // pred_check
        _
      $region58: #{bottleneck_forward.1} parent=5 // pred_check_branch
        %349 = sbr.rel (%p346) target = $region60
      $region59: #{bottleneck_forward.1} parent=5 // pred_region
        %s350 = ssub.s32 %s18, 1
        // Predicated region
        $region61: #{bottleneck_forward.1} parent=59 // pred_check
          %p351 = pneg %p154
        $region62: #{bottleneck_forward.1} parent=59 // pred_check_branch
          %353 = sbr.rel (%p351) target = $region64
        $region63: #{bottleneck_forward.1} parent=59 // pred_region
          %355 = dma.done [#allocation3], 512
        $region64: #{bottleneck_forward.1} parent=59 // pred_fallthru
          _
        // Predicated region
        $region65: #{bottleneck_forward.1} parent=59 // pred_check
          %p356 = pneg %p238
        $region66: #{bottleneck_forward.1} parent=59 // pred_check_branch
          %358 = sbr.rel (%p356) target = $region68
        $region67: #{bottleneck_forward.1} parent=59 // pred_region
          %360 = dma.done [#allocation5], 32
        $region68: #{bottleneck_forward.1} parent=59 // pred_fallthru
          _
        %p361 = scmp.lt.s32.totalorder %s23, 1
        %s362 = scalar_select %p361, %s23, 1
        %s363 = smul.addr %s362, 2
        %s364 = smul.addr %s363, 8
        %s365 = scalar_lea.vmem %s0, %s364
        %p366 = pneg %p44
        %p367 = pneg %p41
        %p368 = scmp.lt.s32.totalorder %s23, 1
        %s369 = scalar_select %p368, %s23, 1
        %s370 = smul.addr %s369, 8
        %s371 = scalar_lea.vmem %s1, %s370
        %p372 = pneg %p70
        %p373 = pneg %p67
        %p374 = pneg %p91
        %p375 = pneg %p88
        %p376 = pneg %p112
        %p377 = pneg %p109
        %p378 = pneg %p133
        %p379 = pneg %p130
        %p380 = pneg %p154
        %p381 = pneg %p151
        %p382 = pneg %p175
        %p383 = pneg %p172
        %p384 = pneg %p196
        %p385 = pneg %p193
        %p386 = pneg %p217
        %p387 = pneg %p214
        %p388 = pneg %p238
        %p389 = pneg %p235
        %p390 = pneg %p264
        %p391 = pneg %p261
        %p392 = scmp.lt.s32.totalorder %s23, 1
        %s393 = scalar_select %p392, %s23, 1
        %s394 = smul.addr %s393, 2
        %s395 = smul.addr %s394, 8
        %s396 = scalar_lea.vmem %s10, %s395
        %p397 = scmp.lt.s32.totalorder %s23, 1
        %s398 = scalar_select %p397, %s23, 1
        %s399 = smul.addr %s398, 2
        %s400 = smul.addr %s399, 8
        %s401 = scalar_lea.vmem %s0, %s400
        %p402 = scmp.lt.s32.totalorder %s23, 1
        %s403 = scalar_select %p402, %s23, 1
        %s404 = smul.addr %s403, 8
        %s405 = scalar_lea.vmem %s1, %s404
        %p406 = scmp.lt.s32.totalorder %s23, 1
        %s407 = scalar_select %p406, %s23, 1
        %s408 = smul.addr %s407, 2
        %s409 = smul.addr %s408, 8
        %s410 = scalar_lea.vmem %s10, %s409
        %v412 = vld [vmem:[%s401] sm:$0xff]
        %v413 = vld [vmem:[%s401 + $0x8] sm:$0xff]
        %v414 = vld [vmem:[%s405] sm:$0xff]
        %v415 = vpack.c.bf16 %v414, %v414
        %v416 = vld [vmem:[%s7] sm:$0xff]
        %v417 = vpack.c.bf16 %v413, %v412
        %v418 = vld [vmem:[%s2] sm:$0xf]
        %v419 = vld [vmem:[%s2 + $0x4] sm:$0xf]
        %v420 = vld [vmem:[%s2 + $0x8] sm:$0xf]
        %v421 = vld [vmem:[%s2 + $0xc] sm:$0xf]
        %v422 = vperm.slane %v416, 0
        %v427 = vunpack.c.l.b16 %v418
        %v428 = vunpack.c.l.b16 %v419
        %v429 = vunpack.c.l.b16 %v420
        %v430 = vunpack.c.l.b16 %v421
        %v431 = vpack.c.b16 %v428, %v427
        %v432 = vpack.c.b16 %v430, %v429
        %vm435 = vcmask 261120
        %v437 = vsel %vm435, %v417, 0
        %439 = vmatpush.bf16.msra.mxu0 0
        %440 = vmatpush.bf16.msra.mxu0 0
        %441 = vmatpush.bf16.msra.mxu0 0
        %442 = vmatpush.bf16.msra.mxu0 0
        %443 = vmatpush.bf16.msra.mxu0 0
        %444 = vmatpush.bf16.msra.mxu0 0
        %445 = vmatpush.bf16.msra.mxu0 %v432
        %446 = vmatpush.bf16.msra.mxu0 %v431
        %447 = vmatmul.bf16.gmra.mxu0 %v437
        %v448 = vpop.f32.mrf.mxu0
        %v449 = vadd.f32 %v422, %v448
        %v450 = vpop.f32.mrf.mxu0
        %v451 = vadd.f32 %v422, %v450
        %452 = vdwg.mxu0
        %v453 = vld [vmem:[%s3] sm:$0xf]
        %v454 = vld [vmem:[%s3 + $0x4] sm:$0xf]
        %v455 = vld [vmem:[%s3 + $0x8] sm:$0xf]
        %v456 = vld [vmem:[%s3 + $0xc] sm:$0xf]
        %v457 = vld [vmem:[%s8] sm:$0x1]
        %v459 = vperm.slane %v457, 0
        %v465 = vunpack.c.l.b16 %v453
        %v466 = vunpack.c.l.b16 %v454
        %v467 = vunpack.c.l.b16 %v455
        %v468 = vunpack.c.l.b16 %v456
        %v469 = vpack.c.b16 %v466, %v465
        %v470 = vpack.c.b16 %v468, %v467
        %v474 = vsel %vm435, %v415, 0
        %476 = vmatpush.bf16.msra.mxu0 0
        %477 = vmatpush.bf16.msra.mxu0 0
        %478 = vmatpush.bf16.msra.mxu0 0
        %479 = vmatpush.bf16.msra.mxu0 0
        %480 = vmatpush.bf16.msra.mxu0 0
        %481 = vmatpush.bf16.msra.mxu0 0
        %482 = vmatpush.bf16.msra.mxu0 %v470
        %483 = vmatpush.bf16.msra.mxu0 %v469
        %484 = vmatmul.bf16.gmra.mxu0 %v474
        %v485 = vpop.f32.mrf.mxu0
        %v486 = vadd.f32 %v459, %v485
        %v487 = vpop.f32.mrf.mxu0
        %488 = vdwg.mxu0
        %v489 = vpack.c.bf16 %v449, %v449
        %v490 = vpack.c.bf16 %v451, %v451
        %v491 = vpack.c.bf16 %v486, %v486
        %494 = vrot.lane.b32.xlu0 %v489, 120
        %v495 = vpop.permute.xlu0 %494
        %496 = vrot.lane.b32.xlu0 %v490, 120
        %v497 = vpop.permute.xlu0 %496
        %498 = vrot.lane.b32.xlu0 %v489, 112
        %v499 = vpop.permute.xlu0 %498
        %500 = vrot.lane.b32.xlu0 %v490, 112
        %v501 = vpop.permute.xlu0 %500
        %502 = vrot.lane.b32.xlu0 %v489, 104
        %v503 = vpop.permute.xlu0 %502
        %504 = vrot.lane.b32.xlu0 %v490, 104
        %v505 = vpop.permute.xlu0 %504
        %507 = vrot.lane.b32.xlu0 %v491, 120
        %v508 = vpop.permute.xlu0 %507
        %509 = vrot.lane.b32.xlu0 %v491, 112
        %v510 = vpop.permute.xlu0 %509
        %511 = vrot.lane.b32.xlu0 %v491, 104
        %v512 = vpop.permute.xlu0 %511
        %v513 = vunpack.c.l.b16 %v489
        %v514 = vunpack.c.l.b16 %v490
        %v515 = vpack.c.b16 %v514, %v513
        %vm516 = vcmask 64512
        %v518 = vsel %vm516, %v515, 0
        %v521 = vsel %vm516, %v491, 0
        %523 = vmatpush.bf16.xpose.msra.mxu0 0
        %524 = vmatpush.bf16.xpose.msra.mxu0 0
        %525 = vmatpush.bf16.xpose.msra.mxu0 0
        %526 = vmatpush.bf16.xpose.msra.mxu0 0
        %527 = vmatpush.bf16.xpose.msra.mxu0 0
        %528 = vmatpush.bf16.xpose.msra.mxu0 0
        %529 = vmatpush.bf16.xpose.msra.mxu0 0
        %530 = vmatpush.bf16.xpose.msra.mxu0 %v521
        %531 = vmatmul.bf16.gmra.mxu0 %v518
        %v532 = vpop.f32.mrf.mxu0
        %v533 = vadd.f32 0.0, %v532
        %v534 = vpop.f32.mrf.mxu0
        %v535 = vadd.f32 0.0, %v534
        %536 = vdwg.mxu0
        %v537 = vunpack.c.l.b16 %v495
        %v538 = vunpack.c.l.b16 %v497
        %v539 = vpack.c.b16 %v538, %v537
        %v541 = vsel %vm516, %v539, 0
        %v544 = vsel %vm516, %v508, 0
        %546 = vmatpush.bf16.xpose.msra.mxu0 0
        %547 = vmatpush.bf16.xpose.msra.mxu0 0
        %548 = vmatpush.bf16.xpose.msra.mxu0 0
        %549 = vmatpush.bf16.xpose.msra.mxu0 0
        %550 = vmatpush.bf16.xpose.msra.mxu0 0
        %551 = vmatpush.bf16.xpose.msra.mxu0 0
        %552 = vmatpush.bf16.xpose.msra.mxu0 0
        %553 = vmatpush.bf16.xpose.msra.mxu0 %v544
        %554 = vmatmul.bf16.gmra.mxu0 %v541
        %v555 = vpop.f32.mrf.mxu0
        %v556 = vadd.f32 0.0, %v555
        %v557 = vpop.f32.mrf.mxu0
        %v558 = vadd.f32 0.0, %v557
        %559 = vdwg.mxu0
        %v560 = vunpack.c.l.b16 %v499
        %v561 = vunpack.c.l.b16 %v501
        %v562 = vpack.c.b16 %v561, %v560
        %v564 = vsel %vm516, %v562, 0
        %v567 = vsel %vm516, %v510, 0
        %569 = vmatpush.bf16.xpose.msra.mxu0 0
        %570 = vmatpush.bf16.xpose.msra.mxu0 0
        %571 = vmatpush.bf16.xpose.msra.mxu0 0
        %572 = vmatpush.bf16.xpose.msra.mxu0 0
        %573 = vmatpush.bf16.xpose.msra.mxu0 0
        %574 = vmatpush.bf16.xpose.msra.mxu0 0
        %575 = vmatpush.bf16.xpose.msra.mxu0 0
        %576 = vmatpush.bf16.xpose.msra.mxu0 %v567
        %577 = vmatmul.bf16.gmra.mxu0 %v564
        %v578 = vpop.f32.mrf.mxu0
        %v579 = vadd.f32 0.0, %v578
        %v580 = vpop.f32.mrf.mxu0
        %v581 = vadd.f32 0.0, %v580
        %582 = vdwg.mxu0
        %v583 = vunpack.c.l.b16 %v503
        %v584 = vunpack.c.l.b16 %v505
        %v585 = vpack.c.b16 %v584, %v583
        %v587 = vsel %vm516, %v585, 0
        %v590 = vsel %vm516, %v512, 0
        %592 = vmatpush.bf16.xpose.msra.mxu0 0
        %593 = vmatpush.bf16.xpose.msra.mxu0 0
        %594 = vmatpush.bf16.xpose.msra.mxu0 0
        %595 = vmatpush.bf16.xpose.msra.mxu0 0
        %596 = vmatpush.bf16.xpose.msra.mxu0 0
        %597 = vmatpush.bf16.xpose.msra.mxu0 0
        %598 = vmatpush.bf16.xpose.msra.mxu0 0
        %599 = vmatpush.bf16.xpose.msra.mxu0 %v590
        %600 = vmatmul.bf16.gmra.mxu0 %v587
        %v601 = vpop.f32.mrf.mxu0
        %v602 = vadd.f32 0.0, %v601
        %v603 = vpop.f32.mrf.mxu0
        %v604 = vadd.f32 0.0, %v603
        %605 = vdwg.mxu0
        %v606 = vsel %vm516, %v533, -inf
        %607 = vmax.xlane.f32.xlu0 %v606
        %v608 = vpop.xlane.xlu0 %607
        %v609 = vsel %vm516, %v535, -inf
        %610 = vmax.xlane.f32.xlu0 %v609
        %v611 = vpop.xlane.xlu0 %610
        %v612 = vsel %vm516, %v556, -inf
        %613 = vmax.xlane.f32.xlu0 %v612
        %v614 = vpop.xlane.xlu0 %613
        %v615 = vsel %vm516, %v558, -inf
        %616 = vmax.xlane.f32.xlu0 %v615
        %v617 = vpop.xlane.xlu0 %616
        %v618 = vsel %vm516, %v579, -inf
        %619 = vmax.xlane.f32.xlu0 %v618
        %v620 = vpop.xlane.xlu0 %619
        %v621 = vsel %vm516, %v581, -inf
        %622 = vmax.xlane.f32.xlu0 %v621
        %v623 = vpop.xlane.xlu0 %622
        %v624 = vsel %vm516, %v602, -inf
        %625 = vmax.xlane.f32.xlu0 %v624
        %v626 = vpop.xlane.xlu0 %625
        %v627 = vsel %vm516, %v604, -inf
        %628 = vmax.xlane.f32.xlu0 %v627
        %v629 = vpop.xlane.xlu0 %628
        %v630 = vsub.f32 %v533, %v608
        %v631 = vsub.f32 %v535, %v611
        %v632 = vsub.f32 %v556, %v614
        %v633 = vsub.f32 %v558, %v617
        %v634 = vsub.f32 %v579, %v620
        %v635 = vsub.f32 %v581, %v623
        %v636 = vsub.f32 %v602, %v626
        %v637 = vsub.f32 %v604, %v629
        %v638 = vmul.f32 %v630, 1.442695
        %v639 = vpow.pop %v638
        %v640 = vmul.f32 %v631, 1.442695
        %v641 = vpow.pop %v640
        %v642 = vmul.f32 %v632, 1.442695
        %v643 = vpow.pop %v642
        %v644 = vmul.f32 %v633, 1.442695
        %v645 = vpow.pop %v644
        %v646 = vmul.f32 %v634, 1.442695
        %v647 = vpow.pop %v646
        %v648 = vmul.f32 %v635, 1.442695
        %v649 = vpow.pop %v648
        %v650 = vmul.f32 %v636, 1.442695
        %v651 = vpow.pop %v650
        %v652 = vmul.f32 %v637, 1.442695
        %v653 = vpow.pop %v652
        %v654 = vsel %vm516, %v639, 0.0
        %655 = vadd.xlane.f32.xlu0 %v654
        %v656 = vpop.xlane.xlu0 %655
        %v657 = vsel %vm516, %v641, 0.0
        %658 = vadd.xlane.f32.xlu0 %v657
        %v659 = vpop.xlane.xlu0 %658
        %v660 = vsel %vm516, %v643, 0.0
        %661 = vadd.xlane.f32.xlu0 %v660
        %v662 = vpop.xlane.xlu0 %661
        %v663 = vsel %vm516, %v645, 0.0
        %664 = vadd.xlane.f32.xlu0 %v663
        %v665 = vpop.xlane.xlu0 %664
        %v666 = vsel %vm516, %v647, 0.0
        %667 = vadd.xlane.f32.xlu0 %v666
        %v668 = vpop.xlane.xlu0 %667
        %v669 = vsel %vm516, %v649, 0.0
        %670 = vadd.xlane.f32.xlu0 %v669
        %v671 = vpop.xlane.xlu0 %670
        %v672 = vsel %vm516, %v651, 0.0
        %673 = vadd.xlane.f32.xlu0 %v672
        %v674 = vpop.xlane.xlu0 %673
        %v675 = vsel %vm516, %v653, 0.0
        %676 = vadd.xlane.f32.xlu0 %v675
        %v677 = vpop.xlane.xlu0 %676
        %v678 = vrcp.pop %v656
        %v679 = vrcp.pop %v659
        %v680 = vrcp.pop %v662
        %v681 = vrcp.pop %v665
        %v682 = vrcp.pop %v668
        %v683 = vrcp.pop %v671
        %v684 = vrcp.pop %v674
        %v685 = vrcp.pop %v677
        %v686 = vmul.f32 %v639, %v678
        %v687 = vmul.f32 %v641, %v679
        %v688 = vmul.f32 %v643, %v680
        %v689 = vmul.f32 %v645, %v681
        %v690 = vmul.f32 %v647, %v682
        %v691 = vmul.f32 %v649, %v683
        %v692 = vmul.f32 %v651, %v684
        %v693 = vmul.f32 %v653, %v685
        %v694 = vpack.c.bf16 %v686, %v686
        %v695 = vpack.c.bf16 %v687, %v687
        %v696 = vpack.c.bf16 %v688, %v688
        %v697 = vpack.c.bf16 %v689, %v689
        %v698 = vpack.c.bf16 %v690, %v690
        %v699 = vpack.c.bf16 %v691, %v691
        %v700 = vpack.c.bf16 %v692, %v692
        %v701 = vpack.c.bf16 %v693, %v693
        %v704 = vunpack.c.l.b16 %v694
        %v705 = vunpack.c.l.b16 %v695
        %v706 = vpack.c.b16 %v705, %v704
        %v707 = vunpack.c.l.b16 %v491
        %v708 = vpack.c.b16 %v707, %v707
        %709 = vrot.lane.b32.xlu0 %v708, 96
        %v710 = vpop.permute.xlu0 %709
        %v712 = vsel %vm516, %v706, 0
        %vm714 = vcmask 1043456
        %v716 = vsel %vm714, %v710, 0
        %718 = vmatpush.bf16.msra.mxu0 0
        %719 = vmatpush.bf16.msra.mxu0 0
        %720 = vmatpush.bf16.msra.mxu0 0
        %721 = vmatpush.bf16.msra.mxu0 0
        %722 = vmatpush.bf16.msra.mxu0 0
        %723 = vmatpush.bf16.msra.mxu0 0
        %724 = vmatpush.bf16.msra.mxu0 0
        %725 = vmatpush.bf16.msra.mxu0 %v716
        %726 = vmatmul.bf16.gmra.mxu0 %v712
        %v727 = vpop.f32.mrf.mxu0
        %v728 = vadd.f32 0.0, %v727
        %v729 = vpop.f32.mrf.mxu0
        %v730 = vadd.f32 0.0, %v729
        %731 = vdwg.mxu0
        %v734 = vunpack.c.l.b16 %v696
        %v735 = vunpack.c.l.b16 %v697
        %v736 = vpack.c.b16 %v735, %v734
        %v737 = vunpack.c.l.b16 %v508
        %v738 = vpack.c.b16 %v737, %v737
        %739 = vrot.lane.b32.xlu0 %v738, 96
        %v740 = vpop.permute.xlu0 %739
        %v742 = vsel %vm516, %v736, 0
        %v745 = vsel %vm714, %v740, 0
        %747 = vmatpush.bf16.msra.mxu0 0
        %748 = vmatpush.bf16.msra.mxu0 0
        %749 = vmatpush.bf16.msra.mxu0 0
        %750 = vmatpush.bf16.msra.mxu0 0
        %751 = vmatpush.bf16.msra.mxu0 0
        %752 = vmatpush.bf16.msra.mxu0 0
        %753 = vmatpush.bf16.msra.mxu0 0
        %754 = vmatpush.bf16.msra.mxu0 %v745
        %755 = vmatmul.bf16.gmra.mxu0 %v742
        %v756 = vpop.f32.mrf.mxu0
        %v757 = vadd.f32 0.0, %v756
        %v758 = vpop.f32.mrf.mxu0
        %v759 = vadd.f32 0.0, %v758
        %760 = vdwg.mxu0
        %v763 = vunpack.c.l.b16 %v698
        %v764 = vunpack.c.l.b16 %v699
        %v765 = vpack.c.b16 %v764, %v763
        %v766 = vunpack.c.l.b16 %v510
        %v767 = vpack.c.b16 %v766, %v766
        %768 = vrot.lane.b32.xlu0 %v767, 96
        %v769 = vpop.permute.xlu0 %768
        %v771 = vsel %vm516, %v765, 0
        %v774 = vsel %vm714, %v769, 0
        %776 = vmatpush.bf16.msra.mxu0 0
        %777 = vmatpush.bf16.msra.mxu0 0
        %778 = vmatpush.bf16.msra.mxu0 0
        %779 = vmatpush.bf16.msra.mxu0 0
        %780 = vmatpush.bf16.msra.mxu0 0
        %781 = vmatpush.bf16.msra.mxu0 0
        %782 = vmatpush.bf16.msra.mxu0 0
        %783 = vmatpush.bf16.msra.mxu0 %v774
        %784 = vmatmul.bf16.gmra.mxu0 %v771
        %v785 = vpop.f32.mrf.mxu0
        %v786 = vadd.f32 0.0, %v785
        %v787 = vpop.f32.mrf.mxu0
        %v788 = vadd.f32 0.0, %v787
        %789 = vdwg.mxu0
        %v792 = vunpack.c.l.b16 %v700
        %v793 = vunpack.c.l.b16 %v701
        %v794 = vpack.c.b16 %v793, %v792
        %v795 = vunpack.c.l.b16 %v512
        %v796 = vpack.c.b16 %v795, %v795
        %797 = vrot.lane.b32.xlu0 %v796, 96
        %v798 = vpop.permute.xlu0 %797
        %v800 = vsel %vm516, %v794, 0
        %v803 = vsel %vm714, %v798, 0
        %805 = vmatpush.bf16.msra.mxu0 0
        %806 = vmatpush.bf16.msra.mxu0 0
        %807 = vmatpush.bf16.msra.mxu0 0
        %808 = vmatpush.bf16.msra.mxu0 0
        %809 = vmatpush.bf16.msra.mxu0 0
        %810 = vmatpush.bf16.msra.mxu0 0
        %811 = vmatpush.bf16.msra.mxu0 0
        %812 = vmatpush.bf16.msra.mxu0 %v803
        %813 = vmatmul.bf16.gmra.mxu0 %v800
        %v814 = vpop.f32.mrf.mxu0
        %v815 = vadd.f32 0.0, %v814
        %v816 = vpop.f32.mrf.mxu0
        %v817 = vadd.f32 0.0, %v816
        %818 = vdwg.mxu0
        %821 = vrot.lane.b32.xlu0 %v757, 8
        %v822 = vpop.permute.xlu0 %821
        %823 = vrot.lane.b32.xlu0 %v759, 8
        %v824 = vpop.permute.xlu0 %823
        %829 = vrot.lane.b32.xlu0 %v786, 16
        %v830 = vpop.permute.xlu0 %829
        %831 = vrot.lane.b32.xlu0 %v788, 16
        %v832 = vpop.permute.xlu0 %831
        %837 = vrot.lane.b32.xlu0 %v815, 24
        %v838 = vpop.permute.xlu0 %837
        %839 = vrot.lane.b32.xlu0 %v817, 24
        %v840 = vpop.permute.xlu0 %839
        %v843 = vsel %vm516, %v728, %v822
        %v844 = vsel %vm516, %v730, %v824
        %vm845 = vcmask 130048
        %v846 = vsel %vm845, %v843, %v830
        %v847 = vsel %vm845, %v844, %v832
        %vm848 = vcmask 195584
        %v849 = vsel %vm848, %v846, %v838
        %v850 = vsel %vm848, %v847, %v840
        %v851 = vpack.c.bf16 %v850, %v849
        %v852 = vld [vmem:[%s4] sm:$0xf]
        %v853 = vld [vmem:[%s4 + $0x4] sm:$0xf]
        %v854 = vld [vmem:[%s4 + $0x8] sm:$0xf]
        %v855 = vld [vmem:[%s4 + $0xc] sm:$0xf]
        %v856 = vperm.slane %v416, 1
        %v861 = vunpack.c.l.b16 %v852
        %v862 = vunpack.c.l.b16 %v853
        %v863 = vunpack.c.l.b16 %v854
        %v864 = vunpack.c.l.b16 %v855
        %v865 = vpack.c.b16 %v862, %v861
        %v866 = vpack.c.b16 %v864, %v863
        %v870 = vsel %vm435, %v851, 0
        %872 = vmatpush.bf16.msra.mxu0 0
        %873 = vmatpush.bf16.msra.mxu0 0
        %874 = vmatpush.bf16.msra.mxu0 0
        %875 = vmatpush.bf16.msra.mxu0 0
        %876 = vmatpush.bf16.msra.mxu0 0
        %877 = vmatpush.bf16.msra.mxu0 0
        %878 = vmatpush.bf16.msra.mxu0 %v866
        %879 = vmatpush.bf16.msra.mxu0 %v865
        %880 = vmatmul.bf16.gmra.mxu0 %v870
        %v881 = vpop.f32.mrf.mxu0
        %v882 = vadd.f32 %v856, %v881
        %v883 = vpop.f32.mrf.mxu0
        %v884 = vadd.f32 %v856, %v883
        %885 = vdwg.mxu0
        %v886 = vadd.f32 %v412, %v882
        %v887 = vadd.f32 %v413, %v884
        %v888 = vsel %vm435, %v886, 0.0
        %889 = vadd.xlane.f32.xlu0 %v888
        %v890 = vpop.xlane.xlu0 %889
        %v891 = vsel %vm435, %v887, 0.0
        %892 = vadd.xlane.f32.xlu0 %v891
        %v893 = vpop.xlane.xlu0 %892
        %v894 = vrcp.pop 32.0
        %v895 = vmul.f32 32.0, %v894
        %v896 = vsub.f32 1.0, %v895
        %v897 = vmul.f32 %v894, %v896
        %v898 = vadd.f32 %v894, %v897
        %vm899 = vweird.f32 %v894
        %v900 = vsel %vm899, %v894, %v898
        %v901 = vmul.f32 %v890, %v900
        %v902 = vmul.f32 %v893, %v900
        %v903 = vsub.f32 %v886, %v901
        %v904 = vsub.f32 %v887, %v902
        %v905 = vmul.f32 %v903, %v903
        %v906 = vmul.f32 %v904, %v904
        %v907 = vsel %vm435, %v905, 0.0
        %908 = vadd.xlane.f32.xlu0 %v907
        %v909 = vpop.xlane.xlu0 %908
        %v910 = vsel %vm435, %v906, 0.0
        %911 = vadd.xlane.f32.xlu0 %v910
        %v912 = vpop.xlane.xlu0 %911
        %v913 = vmul.f32 %v909, %v900
        %v914 = vmul.f32 %v912, %v900
        %v915 = vadd.f32 %v913, 1e-05
        %v916 = vadd.f32 %v914, 1e-05
        %v917 = vrsqrt.pop %v915
        %v918 = vmul.f32 %v917, %v915
        %v919 = vmul.f32 %v918, %v917
        %v920 = vmul.f32 0.5, %v919
        %v921 = vsub.f32 1.5, %v920
        %v922 = vmul.f32 %v917, %v921
        %vm923 = vweird.f32 %v915
        %vm924 = vweird.f32 %v917
        %vm925 = vmor %vm923, %vm924
        %v926 = vsel %vm925, %v917, %v922
        %v927 = vrsqrt.pop %v916
        %v928 = vmul.f32 %v927, %v916
        %v929 = vmul.f32 %v928, %v927
        %v930 = vmul.f32 0.5, %v929
        %v931 = vsub.f32 1.5, %v930
        %v932 = vmul.f32 %v927, %v931
        %vm933 = vweird.f32 %v916
        %vm934 = vweird.f32 %v927
        %vm935 = vmor %vm933, %vm934
        %v936 = vsel %vm935, %v927, %v932
        %v937 = vmul.f32 %v903, %v926
        %v938 = vmul.f32 %v904, %v936
        %v939 = vperm.slane %v416, 2
        %v940 = vmul.f32 %v937, %v939
        %v941 = vmul.f32 %v938, %v939
        %v942 = vperm.slane %v416, 3
        %v943 = vadd.f32 %v940, %v942
        %v944 = vadd.f32 %v941, %v942
        %v945 = vpack.c.bf16 %v944, %v943
        %v946 = vld [vmem:[#allocation2] sm:$0xf]
        %v947 = vld [vmem:[#allocation2 + $0x4] sm:$0xf]
        %v948 = vld [vmem:[#allocation2 + $0x8] sm:$0xf]
        %v949 = vld [vmem:[#allocation2 + $0xc] sm:$0xf]
        %v950 = vld [vmem:[#allocation4] sm:$0x1]
        %v952 = vperm.slane %v950, 0
        %v958 = vunpack.c.l.b16 %v946
        %v959 = vunpack.c.l.b16 %v947
        %v960 = vunpack.c.l.b16 %v948
        %v961 = vunpack.c.l.b16 %v949
        %v962 = vpack.c.b16 %v959, %v958
        %v963 = vpack.c.b16 %v961, %v960
        %v967 = vsel %vm435, %v945, 0
        %969 = vmatpush.bf16.msra.mxu0 0
        %970 = vmatpush.bf16.msra.mxu0 0
        %971 = vmatpush.bf16.msra.mxu0 0
        %972 = vmatpush.bf16.msra.mxu0 0
        %973 = vmatpush.bf16.msra.mxu0 0
        %974 = vmatpush.bf16.msra.mxu0 0
        %975 = vmatpush.bf16.msra.mxu0 %v963
        %976 = vmatpush.bf16.msra.mxu0 %v962
        %977 = vmatmul.bf16.gmra.mxu0 %v967
        %v978 = vpop.f32.mrf.mxu0
        %v979 = vadd.f32 %v952, %v978
        %v980 = vpop.f32.mrf.mxu0
        %v981 = vadd.f32 %v952, %v980
        %982 = vdwg.mxu0
        %v983 = vmax.f32 %v979, 0.0
        %v984 = vmax.f32 %v981, 0.0
        %v985 = vpack.c.bf16 %v984, %v983
        %v986 = vld [vmem:[%s6] sm:$0xf]
        %v987 = vld [vmem:[%s6 + $0x4] sm:$0xf]
        %v988 = vld [vmem:[%s6 + $0x8] sm:$0xf]
        %v989 = vld [vmem:[%s6 + $0xc] sm:$0xf]
        %v990 = vld [vmem:[%s6 + $0x10] sm:$0xf]
        %v991 = vld [vmem:[%s6 + $0x14] sm:$0xf]
        %v992 = vld [vmem:[%s6 + $0x18] sm:$0xf]
        %v993 = vld [vmem:[%s6 + $0x1c] sm:$0xf]
        %v994 = vperm.slane %v416, 4
        %v1003 = vunpack.c.l.b16 %v986
        %v1004 = vunpack.c.l.b16 %v987
        %v1005 = vunpack.c.l.b16 %v988
        %v1006 = vunpack.c.l.b16 %v989
        %v1007 = vunpack.c.l.b16 %v990
        %v1008 = vunpack.c.l.b16 %v991
        %v1009 = vunpack.c.l.b16 %v992
        %v1010 = vunpack.c.l.b16 %v993
        %v1011 = vpack.c.b16 %v1004, %v1003
        %v1012 = vpack.c.b16 %v1006, %v1005
        %v1013 = vpack.c.b16 %v1008, %v1007
        %v1014 = vpack.c.b16 %v1010, %v1009
        %vm1019 = vcmask 523264
        %v1021 = vsel %vm1019, %v985, 0
        %1023 = vmatpush.bf16.msra.mxu0 0
        %1024 = vmatpush.bf16.msra.mxu0 0
        %1025 = vmatpush.bf16.msra.mxu0 0
        %1026 = vmatpush.bf16.msra.mxu0 0
        %1027 = vmatpush.bf16.msra.mxu0 %v1014
        %1028 = vmatpush.bf16.msra.mxu0 %v1013
        %1029 = vmatpush.bf16.msra.mxu0 %v1012
        %1030 = vmatpush.bf16.msra.mxu0 %v1011
        %1031 = vmatmul.bf16.gmra.mxu0 %v1021
        %v1032 = vpop.f32.mrf.mxu0
        %v1033 = vadd.f32 %v994, %v1032
        %v1034 = vpop.f32.mrf.mxu0
        %v1035 = vadd.f32 %v994, %v1034
        %1036 = vdwg.mxu0
        %v1037 = vadd.f32 %v943, %v1033
        %v1038 = vadd.f32 %v944, %v1035
        %v1039 = vsel %vm435, %v1037, 0.0
        %1040 = vadd.xlane.f32.xlu0 %v1039
        %v1041 = vpop.xlane.xlu0 %1040
        %v1042 = vsel %vm435, %v1038, 0.0
        %1043 = vadd.xlane.f32.xlu0 %v1042
        %v1044 = vpop.xlane.xlu0 %1043
        %v1045 = vmul.f32 %v1041, %v900
        %v1046 = vmul.f32 %v1044, %v900
        %v1047 = vsub.f32 %v1037, %v1045
        %v1048 = vsub.f32 %v1038, %v1046
        %v1049 = vmul.f32 %v1047, %v1047
        %v1050 = vmul.f32 %v1048, %v1048
        %v1051 = vsel %vm435, %v1049, 0.0
        %1052 = vadd.xlane.f32.xlu0 %v1051
        %v1053 = vpop.xlane.xlu0 %1052
        %v1054 = vsel %vm435, %v1050, 0.0
        %1055 = vadd.xlane.f32.xlu0 %v1054
        %v1056 = vpop.xlane.xlu0 %1055
        %v1057 = vmul.f32 %v1053, %v900
        %v1058 = vmul.f32 %v1056, %v900
        %v1059 = vadd.f32 %v1057, 1e-05
        %v1060 = vadd.f32 %v1058, 1e-05
        %v1061 = vrsqrt.pop %v1059
        %v1062 = vmul.f32 %v1061, %v1059
        %v1063 = vmul.f32 %v1062, %v1061
        %v1064 = vmul.f32 0.5, %v1063
        %v1065 = vsub.f32 1.5, %v1064
        %v1066 = vmul.f32 %v1061, %v1065
        %vm1067 = vweird.f32 %v1059
        %vm1068 = vweird.f32 %v1061
        %vm1069 = vmor %vm1067, %vm1068
        %v1070 = vsel %vm1069, %v1061, %v1066
        %v1071 = vrsqrt.pop %v1060
        %v1072 = vmul.f32 %v1071, %v1060
        %v1073 = vmul.f32 %v1072, %v1071
        %v1074 = vmul.f32 0.5, %v1073
        %v1075 = vsub.f32 1.5, %v1074
        %v1076 = vmul.f32 %v1071, %v1075
        %vm1077 = vweird.f32 %v1060
        %vm1078 = vweird.f32 %v1071
        %vm1079 = vmor %vm1077, %vm1078
        %v1080 = vsel %vm1079, %v1071, %v1076
        %v1081 = vmul.f32 %v1047, %v1070
        %v1082 = vmul.f32 %v1048, %v1080
        %v1083 = vperm.slane %v416, 5
        %v1084 = vmul.f32 %v1081, %v1083
        %v1085 = vmul.f32 %v1082, %v1083
        %v1086 = vperm.slane %v416, 6
        %v1087 = vadd.f32 %v1084, %v1086
        %v1088 = vadd.f32 %v1085, %v1086
        %s1089 = scalar_lea.vmem %s7, 8
        %v1090 = vld [vmem:[%s1089] sm:$0xff]
        %v1091 = vpack.c.bf16 %v1088, %v1087
        %s1092 = scalar_lea.vmem %s2, 16
        %v1093 = vld [vmem:[%s1092] sm:$0xf]
        %v1094 = vld [vmem:[%s1092 + $0x4] sm:$0xf]
        %v1095 = vld [vmem:[%s1092 + $0x8] sm:$0xf]
        %v1096 = vld [vmem:[%s1092 + $0xc] sm:$0xf]
        %v1097 = vperm.slane %v1090, 0
        %v1102 = vunpack.c.l.b16 %v1093
        %v1103 = vunpack.c.l.b16 %v1094
        %v1104 = vunpack.c.l.b16 %v1095
        %v1105 = vunpack.c.l.b16 %v1096
        %v1106 = vpack.c.b16 %v1103, %v1102
        %v1107 = vpack.c.b16 %v1105, %v1104
        %v1111 = vsel %vm435, %v1091, 0
        %1113 = vmatpush.bf16.msra.mxu0 0
        %1114 = vmatpush.bf16.msra.mxu0 0
        %1115 = vmatpush.bf16.msra.mxu0 0
        %1116 = vmatpush.bf16.msra.mxu0 0
        %1117 = vmatpush.bf16.msra.mxu0 0
        %1118 = vmatpush.bf16.msra.mxu0 0
        %1119 = vmatpush.bf16.msra.mxu0 %v1107
        %1120 = vmatpush.bf16.msra.mxu0 %v1106
        %1121 = vmatmul.bf16.gmra.mxu0 %v1111
        %v1122 = vpop.f32.mrf.mxu0
        %v1123 = vadd.f32 %v1097, %v1122
        %v1124 = vpop.f32.mrf.mxu0
        %v1125 = vadd.f32 %v1097, %v1124
        %1126 = vdwg.mxu0
        %s1127 = scalar_lea.vmem %s3, 16
        %v1128 = vld [vmem:[%s1127] sm:$0xf]
        %v1129 = vld [vmem:[%s1127 + $0x4] sm:$0xf]
        %v1130 = vld [vmem:[%s1127 + $0x8] sm:$0xf]
        %v1131 = vld [vmem:[%s1127 + $0xc] sm:$0xf]
        %s1132 = scalar_lea.vmem %s8, 1
        %v1133 = vld [vmem:[%s1132] sm:$0x1]
        %v1135 = vperm.slane %v1133, 0
        %v1141 = vunpack.c.l.b16 %v1128
        %v1142 = vunpack.c.l.b16 %v1129
        %v1143 = vunpack.c.l.b16 %v1130
        %v1144 = vunpack.c.l.b16 %v1131
        %v1145 = vpack.c.b16 %v1142, %v1141
        %v1146 = vpack.c.b16 %v1144, %v1143
        %1149 = vmatpush.bf16.msra.mxu0 0
        %1150 = vmatpush.bf16.msra.mxu0 0
        %1151 = vmatpush.bf16.msra.mxu0 0
        %1152 = vmatpush.bf16.msra.mxu0 0
        %1153 = vmatpush.bf16.msra.mxu0 0
        %1154 = vmatpush.bf16.msra.mxu0 0
        %1155 = vmatpush.bf16.msra.mxu0 %v1146
        %1156 = vmatpush.bf16.msra.mxu0 %v1145
        %1157 = vmatmul.bf16.gmra.mxu0 %v474
        %v1158 = vpop.f32.mrf.mxu0
        %v1159 = vadd.f32 %v1135, %v1158
        %v1160 = vpop.f32.mrf.mxu0
        %1161 = vdwg.mxu0
        %v1162 = vpack.c.bf16 %v1123, %v1123
        %v1163 = vpack.c.bf16 %v1125, %v1125
        %v1164 = vpack.c.bf16 %v1159, %v1159
        %1167 = vrot.lane.b32.xlu0 %v1162, 120
        %v1168 = vpop.permute.xlu0 %1167
        %1169 = vrot.lane.b32.xlu0 %v1163, 120
        %v1170 = vpop.permute.xlu0 %1169
        %1171 = vrot.lane.b32.xlu0 %v1162, 112
        %v1172 = vpop.permute.xlu0 %1171
        %1173 = vrot.lane.b32.xlu0 %v1163, 112
        %v1174 = vpop.permute.xlu0 %1173
        %1175 = vrot.lane.b32.xlu0 %v1162, 104
        %v1176 = vpop.permute.xlu0 %1175
        %1177 = vrot.lane.b32.xlu0 %v1163, 104
        %v1178 = vpop.permute.xlu0 %1177
        %1180 = vrot.lane.b32.xlu0 %v1164, 120
        %v1181 = vpop.permute.xlu0 %1180
        %1182 = vrot.lane.b32.xlu0 %v1164, 112
        %v1183 = vpop.permute.xlu0 %1182
        %1184 = vrot.lane.b32.xlu0 %v1164, 104
        %v1185 = vpop.permute.xlu0 %1184
        %v1186 = vunpack.c.l.b16 %v1162
        %v1187 = vunpack.c.l.b16 %v1163
        %v1188 = vpack.c.b16 %v1187, %v1186
        %v1190 = vsel %vm516, %v1188, 0
        %v1193 = vsel %vm516, %v1164, 0
        %1195 = vmatpush.bf16.xpose.msra.mxu0 0
        %1196 = vmatpush.bf16.xpose.msra.mxu0 0
        %1197 = vmatpush.bf16.xpose.msra.mxu0 0
        %1198 = vmatpush.bf16.xpose.msra.mxu0 0
        %1199 = vmatpush.bf16.xpose.msra.mxu0 0
        %1200 = vmatpush.bf16.xpose.msra.mxu0 0
        %1201 = vmatpush.bf16.xpose.msra.mxu0 0
        %1202 = vmatpush.bf16.xpose.msra.mxu0 %v1193
        %1203 = vmatmul.bf16.gmra.mxu0 %v1190
        %v1204 = vpop.f32.mrf.mxu0
        %v1205 = vadd.f32 0.0, %v1204
        %v1206 = vpop.f32.mrf.mxu0
        %v1207 = vadd.f32 0.0, %v1206
        %1208 = vdwg.mxu0
        %v1209 = vunpack.c.l.b16 %v1168
        %v1210 = vunpack.c.l.b16 %v1170
        %v1211 = vpack.c.b16 %v1210, %v1209
        %v1213 = vsel %vm516, %v1211, 0
        %v1216 = vsel %vm516, %v1181, 0
        %1218 = vmatpush.bf16.xpose.msra.mxu0 0
        %1219 = vmatpush.bf16.xpose.msra.mxu0 0
        %1220 = vmatpush.bf16.xpose.msra.mxu0 0
        %1221 = vmatpush.bf16.xpose.msra.mxu0 0
        %1222 = vmatpush.bf16.xpose.msra.mxu0 0
        %1223 = vmatpush.bf16.xpose.msra.mxu0 0
        %1224 = vmatpush.bf16.xpose.msra.mxu0 0
        %1225 = vmatpush.bf16.xpose.msra.mxu0 %v1216
        %1226 = vmatmul.bf16.gmra.mxu0 %v1213
        %v1227 = vpop.f32.mrf.mxu0
        %v1228 = vadd.f32 0.0, %v1227
        %v1229 = vpop.f32.mrf.mxu0
        %v1230 = vadd.f32 0.0, %v1229
        %1231 = vdwg.mxu0
        %v1232 = vunpack.c.l.b16 %v1172
        %v1233 = vunpack.c.l.b16 %v1174
        %v1234 = vpack.c.b16 %v1233, %v1232
        %v1236 = vsel %vm516, %v1234, 0
        %v1239 = vsel %vm516, %v1183, 0
        %1241 = vmatpush.bf16.xpose.msra.mxu0 0
        %1242 = vmatpush.bf16.xpose.msra.mxu0 0
        %1243 = vmatpush.bf16.xpose.msra.mxu0 0
        %1244 = vmatpush.bf16.xpose.msra.mxu0 0
        %1245 = vmatpush.bf16.xpose.msra.mxu0 0
        %1246 = vmatpush.bf16.xpose.msra.mxu0 0
        %1247 = vmatpush.bf16.xpose.msra.mxu0 0
        %1248 = vmatpush.bf16.xpose.msra.mxu0 %v1239
        %1249 = vmatmul.bf16.gmra.mxu0 %v1236
        %v1250 = vpop.f32.mrf.mxu0
        %v1251 = vadd.f32 0.0, %v1250
        %v1252 = vpop.f32.mrf.mxu0
        %v1253 = vadd.f32 0.0, %v1252
        %1254 = vdwg.mxu0
        %v1255 = vunpack.c.l.b16 %v1176
        %v1256 = vunpack.c.l.b16 %v1178
        %v1257 = vpack.c.b16 %v1256, %v1255
        %v1259 = vsel %vm516, %v1257, 0
        %v1262 = vsel %vm516, %v1185, 0
        %1264 = vmatpush.bf16.xpose.msra.mxu0 0
        %1265 = vmatpush.bf16.xpose.msra.mxu0 0
        %1266 = vmatpush.bf16.xpose.msra.mxu0 0
        %1267 = vmatpush.bf16.xpose.msra.mxu0 0
        %1268 = vmatpush.bf16.xpose.msra.mxu0 0
        %1269 = vmatpush.bf16.xpose.msra.mxu0 0
        %1270 = vmatpush.bf16.xpose.msra.mxu0 0
        %1271 = vmatpush.bf16.xpose.msra.mxu0 %v1262
        %1272 = vmatmul.bf16.gmra.mxu0 %v1259
        %v1273 = vpop.f32.mrf.mxu0
        %v1274 = vadd.f32 0.0, %v1273
        %v1275 = vpop.f32.mrf.mxu0
        %v1276 = vadd.f32 0.0, %v1275
        %1277 = vdwg.mxu0
        %v1278 = vsel %vm516, %v1205, -inf
        %1279 = vmax.xlane.f32.xlu0 %v1278
        %v1280 = vpop.xlane.xlu0 %1279
        %v1281 = vsel %vm516, %v1207, -inf
        %1282 = vmax.xlane.f32.xlu0 %v1281
        %v1283 = vpop.xlane.xlu0 %1282
        %v1284 = vsel %vm516, %v1228, -inf
        %1285 = vmax.xlane.f32.xlu0 %v1284
        %v1286 = vpop.xlane.xlu0 %1285
        %v1287 = vsel %vm516, %v1230, -inf
        %1288 = vmax.xlane.f32.xlu0 %v1287
        %v1289 = vpop.xlane.xlu0 %1288
        %v1290 = vsel %vm516, %v1251, -inf
        %1291 = vmax.xlane.f32.xlu0 %v1290
        %v1292 = vpop.xlane.xlu0 %1291
        %v1293 = vsel %vm516, %v1253, -inf
        %1294 = vmax.xlane.f32.xlu0 %v1293
        %v1295 = vpop.xlane.xlu0 %1294
        %v1296 = vsel %vm516, %v1274, -inf
        %1297 = vmax.xlane.f32.xlu0 %v1296
        %v1298 = vpop.xlane.xlu0 %1297
        %v1299 = vsel %vm516, %v1276, -inf
        %1300 = vmax.xlane.f32.xlu0 %v1299
        %v1301 = vpop.xlane.xlu0 %1300
        %v1302 = vsub.f32 %v1205, %v1280
        %v1303 = vsub.f32 %v1207, %v1283
        %v1304 = vsub.f32 %v1228, %v1286
        %v1305 = vsub.f32 %v1230, %v1289
        %v1306 = vsub.f32 %v1251, %v1292
        %v1307 = vsub.f32 %v1253, %v1295
        %v1308 = vsub.f32 %v1274, %v1298
        %v1309 = vsub.f32 %v1276, %v1301
        %v1310 = vmul.f32 %v1302, 1.442695
        %v1311 = vpow.pop %v1310
        %v1312 = vmul.f32 %v1303, 1.442695
        %v1313 = vpow.pop %v1312
        %v1314 = vmul.f32 %v1304, 1.442695
        %v1315 = vpow.pop %v1314
        %v1316 = vmul.f32 %v1305, 1.442695
        %v1317 = vpow.pop %v1316
        %v1318 = vmul.f32 %v1306, 1.442695
        %v1319 = vpow.pop %v1318
        %v1320 = vmul.f32 %v1307, 1.442695
        %v1321 = vpow.pop %v1320
        %v1322 = vmul.f32 %v1308, 1.442695
        %v1323 = vpow.pop %v1322
        %v1324 = vmul.f32 %v1309, 1.442695
        %v1325 = vpow.pop %v1324
        %v1326 = vsel %vm516, %v1311, 0.0
        %1327 = vadd.xlane.f32.xlu0 %v1326
        %v1328 = vpop.xlane.xlu0 %1327
        %v1329 = vsel %vm516, %v1313, 0.0
        %1330 = vadd.xlane.f32.xlu0 %v1329
        %v1331 = vpop.xlane.xlu0 %1330
        %v1332 = vsel %vm516, %v1315, 0.0
        %1333 = vadd.xlane.f32.xlu0 %v1332
        %v1334 = vpop.xlane.xlu0 %1333
        %v1335 = vsel %vm516, %v1317, 0.0
        %1336 = vadd.xlane.f32.xlu0 %v1335
        %v1337 = vpop.xlane.xlu0 %1336
        %v1338 = vsel %vm516, %v1319, 0.0
        %1339 = vadd.xlane.f32.xlu0 %v1338
        %v1340 = vpop.xlane.xlu0 %1339
        %v1341 = vsel %vm516, %v1321, 0.0
        %1342 = vadd.xlane.f32.xlu0 %v1341
        %v1343 = vpop.xlane.xlu0 %1342
        %v1344 = vsel %vm516, %v1323, 0.0
        %1345 = vadd.xlane.f32.xlu0 %v1344
        %v1346 = vpop.xlane.xlu0 %1345
        %v1347 = vsel %vm516, %v1325, 0.0
        %1348 = vadd.xlane.f32.xlu0 %v1347
        %v1349 = vpop.xlane.xlu0 %1348
        %v1350 = vrcp.pop %v1328
        %v1351 = vrcp.pop %v1331
        %v1352 = vrcp.pop %v1334
        %v1353 = vrcp.pop %v1337
        %v1354 = vrcp.pop %v1340
        %v1355 = vrcp.pop %v1343
        %v1356 = vrcp.pop %v1346
        %v1357 = vrcp.pop %v1349
        %v1358 = vmul.f32 %v1311, %v1350
        %v1359 = vmul.f32 %v1313, %v1351
        %v1360 = vmul.f32 %v1315, %v1352
        %v1361 = vmul.f32 %v1317, %v1353
        %v1362 = vmul.f32 %v1319, %v1354
        %v1363 = vmul.f32 %v1321, %v1355
        %v1364 = vmul.f32 %v1323, %v1356
        %v1365 = vmul.f32 %v1325, %v1357
        %v1366 = vpack.c.bf16 %v1358, %v1358
        %v1367 = vpack.c.bf16 %v1359, %v1359
        %v1368 = vpack.c.bf16 %v1360, %v1360
        %v1369 = vpack.c.bf16 %v1361, %v1361
        %v1370 = vpack.c.bf16 %v1362, %v1362
        %v1371 = vpack.c.bf16 %v1363, %v1363
        %v1372 = vpack.c.bf16 %v1364, %v1364
        %v1373 = vpack.c.bf16 %v1365, %v1365
        %v1376 = vunpack.c.l.b16 %v1366
        %v1377 = vunpack.c.l.b16 %v1367
        %v1378 = vpack.c.b16 %v1377, %v1376
        %v1379 = vunpack.c.l.b16 %v1164
        %v1380 = vpack.c.b16 %v1379, %v1379
        %1381 = vrot.lane.b32.xlu0 %v1380, 96
        %v1382 = vpop.permute.xlu0 %1381
        %v1384 = vsel %vm516, %v1378, 0
        %v1387 = vsel %vm714, %v1382, 0
        %1389 = vmatpush.bf16.msra.mxu0 0
        %1390 = vmatpush.bf16.msra.mxu0 0
        %1391 = vmatpush.bf16.msra.mxu0 0
        %1392 = vmatpush.bf16.msra.mxu0 0
        %1393 = vmatpush.bf16.msra.mxu0 0
        %1394 = vmatpush.bf16.msra.mxu0 0
        %1395 = vmatpush.bf16.msra.mxu0 0
        %1396 = vmatpush.bf16.msra.mxu0 %v1387
        %1397 = vmatmul.bf16.gmra.mxu0 %v1384
        %v1398 = vpop.f32.mrf.mxu0
        %v1399 = vadd.f32 0.0, %v1398
        %v1400 = vpop.f32.mrf.mxu0
        %v1401 = vadd.f32 0.0, %v1400
        %1402 = vdwg.mxu0
        %v1405 = vunpack.c.l.b16 %v1368
        %v1406 = vunpack.c.l.b16 %v1369
        %v1407 = vpack.c.b16 %v1406, %v1405
        %v1408 = vunpack.c.l.b16 %v1181
        %v1409 = vpack.c.b16 %v1408, %v1408
        %1410 = vrot.lane.b32.xlu0 %v1409, 96
        %v1411 = vpop.permute.xlu0 %1410
        %v1413 = vsel %vm516, %v1407, 0
        %v1416 = vsel %vm714, %v1411, 0
        %1418 = vmatpush.bf16.msra.mxu0 0
        %1419 = vmatpush.bf16.msra.mxu0 0
        %1420 = vmatpush.bf16.msra.mxu0 0
        %1421 = vmatpush.bf16.msra.mxu0 0
        %1422 = vmatpush.bf16.msra.mxu0 0
        %1423 = vmatpush.bf16.msra.mxu0 0
        %1424 = vmatpush.bf16.msra.mxu0 0
        %1425 = vmatpush.bf16.msra.mxu0 %v1416
        %1426 = vmatmul.bf16.gmra.mxu0 %v1413
        %v1427 = vpop.f32.mrf.mxu0
        %v1428 = vadd.f32 0.0, %v1427
        %v1429 = vpop.f32.mrf.mxu0
        %v1430 = vadd.f32 0.0, %v1429
        %1431 = vdwg.mxu0
        %v1434 = vunpack.c.l.b16 %v1370
        %v1435 = vunpack.c.l.b16 %v1371
        %v1436 = vpack.c.b16 %v1435, %v1434
        %v1437 = vunpack.c.l.b16 %v1183
        %v1438 = vpack.c.b16 %v1437, %v1437
        %1439 = vrot.lane.b32.xlu0 %v1438, 96
        %v1440 = vpop.permute.xlu0 %1439
        %v1442 = vsel %vm516, %v1436, 0
        %v1445 = vsel %vm714, %v1440, 0
        %1447 = vmatpush.bf16.msra.mxu0 0
        %1448 = vmatpush.bf16.msra.mxu0 0
        %1449 = vmatpush.bf16.msra.mxu0 0
        %1450 = vmatpush.bf16.msra.mxu0 0
        %1451 = vmatpush.bf16.msra.mxu0 0
        %1452 = vmatpush.bf16.msra.mxu0 0
        %1453 = vmatpush.bf16.msra.mxu0 0
        %1454 = vmatpush.bf16.msra.mxu0 %v1445
        %1455 = vmatmul.bf16.gmra.mxu0 %v1442
        %v1456 = vpop.f32.mrf.mxu0
        %v1457 = vadd.f32 0.0, %v1456
        %v1458 = vpop.f32.mrf.mxu0
        %v1459 = vadd.f32 0.0, %v1458
        %1460 = vdwg.mxu0
        %v1463 = vunpack.c.l.b16 %v1372
        %v1464 = vunpack.c.l.b16 %v1373
        %v1465 = vpack.c.b16 %v1464, %v1463
        %v1466 = vunpack.c.l.b16 %v1185
        %v1467 = vpack.c.b16 %v1466, %v1466
        %1468 = vrot.lane.b32.xlu0 %v1467, 96
        %v1469 = vpop.permute.xlu0 %1468
        %v1471 = vsel %vm516, %v1465, 0
        %v1474 = vsel %vm714, %v1469, 0
        %1476 = vmatpush.bf16.msra.mxu0 0
        %1477 = vmatpush.bf16.msra.mxu0 0
        %1478 = vmatpush.bf16.msra.mxu0 0
        %1479 = vmatpush.bf16.msra.mxu0 0
        %1480 = vmatpush.bf16.msra.mxu0 0
        %1481 = vmatpush.bf16.msra.mxu0 0
        %1482 = vmatpush.bf16.msra.mxu0 0
        %1483 = vmatpush.bf16.msra.mxu0 %v1474
        %1484 = vmatmul.bf16.gmra.mxu0 %v1471
        %v1485 = vpop.f32.mrf.mxu0
        %v1486 = vadd.f32 0.0, %v1485
        %v1487 = vpop.f32.mrf.mxu0
        %v1488 = vadd.f32 0.0, %v1487
        %1489 = vdwg.mxu0
        %1492 = vrot.lane.b32.xlu0 %v1428, 8
        %v1493 = vpop.permute.xlu0 %1492
        %1494 = vrot.lane.b32.xlu0 %v1430, 8
        %v1495 = vpop.permute.xlu0 %1494
        %1500 = vrot.lane.b32.xlu0 %v1457, 16
        %v1501 = vpop.permute.xlu0 %1500
        %1502 = vrot.lane.b32.xlu0 %v1459, 16
        %v1503 = vpop.permute.xlu0 %1502
        %1508 = vrot.lane.b32.xlu0 %v1486, 24
        %v1509 = vpop.permute.xlu0 %1508
        %1510 = vrot.lane.b32.xlu0 %v1488, 24
        %v1511 = vpop.permute.xlu0 %1510
        %v1514 = vsel %vm516, %v1399, %v1493
        %v1515 = vsel %vm516, %v1401, %v1495
        %v1516 = vsel %vm845, %v1514, %v1501
        %v1517 = vsel %vm845, %v1515, %v1503
        %v1518 = vsel %vm848, %v1516, %v1509
        %v1519 = vsel %vm848, %v1517, %v1511
        %v1520 = vpack.c.bf16 %v1519, %v1518
        %s1521 = scalar_lea.vmem %s4, 16
        %v1522 = vld [vmem:[%s1521] sm:$0xf]
        %v1523 = vld [vmem:[%s1521 + $0x4] sm:$0xf]
        %v1524 = vld [vmem:[%s1521 + $0x8] sm:$0xf]
        %v1525 = vld [vmem:[%s1521 + $0xc] sm:$0xf]
        %v1526 = vperm.slane %v1090, 1
        %v1531 = vunpack.c.l.b16 %v1522
        %v1532 = vunpack.c.l.b16 %v1523
        %v1533 = vunpack.c.l.b16 %v1524
        %v1534 = vunpack.c.l.b16 %v1525
        %v1535 = vpack.c.b16 %v1532, %v1531
        %v1536 = vpack.c.b16 %v1534, %v1533
        %v1540 = vsel %vm435, %v1520, 0
        %1542 = vmatpush.bf16.msra.mxu0 0
        %1543 = vmatpush.bf16.msra.mxu0 0
        %1544 = vmatpush.bf16.msra.mxu0 0
        %1545 = vmatpush.bf16.msra.mxu0 0
        %1546 = vmatpush.bf16.msra.mxu0 0
        %1547 = vmatpush.bf16.msra.mxu0 0
        %1548 = vmatpush.bf16.msra.mxu0 %v1536
        %1549 = vmatpush.bf16.msra.mxu0 %v1535
        %1550 = vmatmul.bf16.gmra.mxu0 %v1540
        %v1551 = vpop.f32.mrf.mxu0
        %v1552 = vadd.f32 %v1526, %v1551
        %v1553 = vpop.f32.mrf.mxu0
        %v1554 = vadd.f32 %v1526, %v1553
        %1555 = vdwg.mxu0
        %v1556 = vadd.f32 %v1087, %v1552
        %v1557 = vadd.f32 %v1088, %v1554
        %v1558 = vsel %vm435, %v1556, 0.0
        %1559 = vadd.xlane.f32.xlu0 %v1558
        %v1560 = vpop.xlane.xlu0 %1559
        %v1561 = vsel %vm435, %v1557, 0.0
        %1562 = vadd.xlane.f32.xlu0 %v1561
        %v1563 = vpop.xlane.xlu0 %1562
        %v1564 = vmul.f32 %v1560, %v900
        %v1565 = vmul.f32 %v1563, %v900
        %v1566 = vsub.f32 %v1556, %v1564
        %v1567 = vsub.f32 %v1557, %v1565
        %v1568 = vmul.f32 %v1566, %v1566
        %v1569 = vmul.f32 %v1567, %v1567
        %v1570 = vsel %vm435, %v1568, 0.0
        %1571 = vadd.xlane.f32.xlu0 %v1570
        %v1572 = vpop.xlane.xlu0 %1571
        %v1573 = vsel %vm435, %v1569, 0.0
        %1574 = vadd.xlane.f32.xlu0 %v1573
        %v1575 = vpop.xlane.xlu0 %1574
        %v1576 = vmul.f32 %v1572, %v900
        %v1577 = vmul.f32 %v1575, %v900
        %v1578 = vadd.f32 %v1576, 1e-05
        %v1579 = vadd.f32 %v1577, 1e-05
        %v1580 = vrsqrt.pop %v1578
        %v1581 = vmul.f32 %v1580, %v1578
        %v1582 = vmul.f32 %v1581, %v1580
        %v1583 = vmul.f32 0.5, %v1582
        %v1584 = vsub.f32 1.5, %v1583
        %v1585 = vmul.f32 %v1580, %v1584
        %vm1586 = vweird.f32 %v1578
        %vm1587 = vweird.f32 %v1580
        %vm1588 = vmor %vm1586, %vm1587
        %v1589 = vsel %vm1588, %v1580, %v1585
        %v1590 = vrsqrt.pop %v1579
        %v1591 = vmul.f32 %v1590, %v1579
        %v1592 = vmul.f32 %v1591, %v1590
        %v1593 = vmul.f32 0.5, %v1592
        %v1594 = vsub.f32 1.5, %v1593
        %v1595 = vmul.f32 %v1590, %v1594
        %vm1596 = vweird.f32 %v1579
        %vm1597 = vweird.f32 %v1590
        %vm1598 = vmor %vm1596, %vm1597
        %v1599 = vsel %vm1598, %v1590, %v1595
        %v1600 = vmul.f32 %v1566, %v1589
        %v1601 = vmul.f32 %v1567, %v1599
        %v1602 = vperm.slane %v1090, 2
        %v1603 = vmul.f32 %v1600, %v1602
        %v1604 = vmul.f32 %v1601, %v1602
        %v1605 = vperm.slane %v1090, 3
        %v1606 = vadd.f32 %v1603, %v1605
        %v1607 = vadd.f32 %v1604, %v1605
        %v1608 = vpack.c.bf16 %v1607, %v1606
        %s1609 = scalar_lea.vmem [#allocation2], 16
        %v1610 = vld [vmem:[%s1609] sm:$0xf]
        %v1611 = vld [vmem:[%s1609 + $0x4] sm:$0xf]
        %v1612 = vld [vmem:[%s1609 + $0x8] sm:$0xf]
        %v1613 = vld [vmem:[%s1609 + $0xc] sm:$0xf]
        %s1614 = scalar_lea.vmem [#allocation4], 1
        %v1615 = vld [vmem:[%s1614] sm:$0x1]
        %v1617 = vperm.slane %v1615, 0
        %v1623 = vunpack.c.l.b16 %v1610
        %v1624 = vunpack.c.l.b16 %v1611
        %v1625 = vunpack.c.l.b16 %v1612
        %v1626 = vunpack.c.l.b16 %v1613
        %v1627 = vpack.c.b16 %v1624, %v1623
        %v1628 = vpack.c.b16 %v1626, %v1625
        %v1632 = vsel %vm435, %v1608, 0
        %1634 = vmatpush.bf16.msra.mxu0 0
        %1635 = vmatpush.bf16.msra.mxu0 0
        %1636 = vmatpush.bf16.msra.mxu0 0
        %1637 = vmatpush.bf16.msra.mxu0 0
        %1638 = vmatpush.bf16.msra.mxu0 0
        %1639 = vmatpush.bf16.msra.mxu0 0
        %1640 = vmatpush.bf16.msra.mxu0 %v1628
        %1641 = vmatpush.bf16.msra.mxu0 %v1627
        %1642 = vmatmul.bf16.gmra.mxu0 %v1632
        %v1643 = vpop.f32.mrf.mxu0
        %v1644 = vadd.f32 %v1617, %v1643
        %v1645 = vpop.f32.mrf.mxu0
        %v1646 = vadd.f32 %v1617, %v1645
        %1647 = vdwg.mxu0
        %v1648 = vmax.f32 %v1644, 0.0
        %v1649 = vmax.f32 %v1646, 0.0
        %v1650 = vpack.c.bf16 %v1649, %v1648
        %s1651 = scalar_lea.vmem %s6, 32
        %v1652 = vld [vmem:[%s1651] sm:$0xf]
        %v1653 = vld [vmem:[%s1651 + $0x4] sm:$0xf]
        %v1654 = vld [vmem:[%s1651 + $0x8] sm:$0xf]
        %v1655 = vld [vmem:[%s1651 + $0xc] sm:$0xf]
        %v1656 = vld [vmem:[%s1651 + $0x10] sm:$0xf]
        %v1657 = vld [vmem:[%s1651 + $0x14] sm:$0xf]
        %v1658 = vld [vmem:[%s1651 + $0x18] sm:$0xf]
        %v1659 = vld [vmem:[%s1651 + $0x1c] sm:$0xf]
        %v1660 = vperm.slane %v1090, 4
        %v1669 = vunpack.c.l.b16 %v1652
        %v1670 = vunpack.c.l.b16 %v1653
        %v1671 = vunpack.c.l.b16 %v1654
        %v1672 = vunpack.c.l.b16 %v1655
        %v1673 = vunpack.c.l.b16 %v1656
        %v1674 = vunpack.c.l.b16 %v1657
        %v1675 = vunpack.c.l.b16 %v1658
        %v1676 = vunpack.c.l.b16 %v1659
        %v1677 = vpack.c.b16 %v1670, %v1669
        %v1678 = vpack.c.b16 %v1672, %v1671
        %v1679 = vpack.c.b16 %v1674, %v1673
        %v1680 = vpack.c.b16 %v1676, %v1675
        %v1686 = vsel %vm1019, %v1650, 0
        %1688 = vmatpush.bf16.msra.mxu0 0
        %1689 = vmatpush.bf16.msra.mxu0 0
        %1690 = vmatpush.bf16.msra.mxu0 0
        %1691 = vmatpush.bf16.msra.mxu0 0
        %1692 = vmatpush.bf16.msra.mxu0 %v1680
        %1693 = vmatpush.bf16.msra.mxu0 %v1679
        %1694 = vmatpush.bf16.msra.mxu0 %v1678
        %1695 = vmatpush.bf16.msra.mxu0 %v1677
        %1696 = vmatmul.bf16.gmra.mxu0 %v1686
        %v1697 = vpop.f32.mrf.mxu0
        %v1698 = vadd.f32 %v1660, %v1697
        %v1699 = vpop.f32.mrf.mxu0
        %v1700 = vadd.f32 %v1660, %v1699
        %1701 = vdwg.mxu0
        %v1702 = vadd.f32 %v1606, %v1698
        %v1703 = vadd.f32 %v1607, %v1700
        %v1704 = vsel %vm435, %v1702, 0.0
        %1705 = vadd.xlane.f32.xlu0 %v1704
        %v1706 = vpop.xlane.xlu0 %1705
        %v1707 = vsel %vm435, %v1703, 0.0
        %1708 = vadd.xlane.f32.xlu0 %v1707
        %v1709 = vpop.xlane.xlu0 %1708
        %v1710 = vmul.f32 %v1706, %v900
        %v1711 = vmul.f32 %v1709, %v900
        %v1712 = vsub.f32 %v1702, %v1710
        %v1713 = vsub.f32 %v1703, %v1711
        %v1714 = vmul.f32 %v1712, %v1712
        %v1715 = vmul.f32 %v1713, %v1713
        %v1716 = vsel %vm435, %v1714, 0.0
        %1717 = vadd.xlane.f32.xlu0 %v1716
        %v1718 = vpop.xlane.xlu0 %1717
        %v1719 = vsel %vm435, %v1715, 0.0
        %1720 = vadd.xlane.f32.xlu0 %v1719
        %v1721 = vpop.xlane.xlu0 %1720
        %v1722 = vmul.f32 %v1718, %v900
        %v1723 = vmul.f32 %v1721, %v900
        %v1724 = vadd.f32 %v1722, 1e-05
        %v1725 = vadd.f32 %v1723, 1e-05
        %v1726 = vrsqrt.pop %v1724
        %v1727 = vmul.f32 %v1726, %v1724
        %v1728 = vmul.f32 %v1727, %v1726
        %v1729 = vmul.f32 0.5, %v1728
        %v1730 = vsub.f32 1.5, %v1729
        %v1731 = vmul.f32 %v1726, %v1730
        %vm1732 = vweird.f32 %v1724
        %vm1733 = vweird.f32 %v1726
        %vm1734 = vmor %vm1732, %vm1733
        %v1735 = vsel %vm1734, %v1726, %v1731
        %v1736 = vrsqrt.pop %v1725
        %v1737 = vmul.f32 %v1736, %v1725
        %v1738 = vmul.f32 %v1737, %v1736
        %v1739 = vmul.f32 0.5, %v1738
        %v1740 = vsub.f32 1.5, %v1739
        %v1741 = vmul.f32 %v1736, %v1740
        %vm1742 = vweird.f32 %v1725
        %vm1743 = vweird.f32 %v1736
        %vm1744 = vmor %vm1742, %vm1743
        %v1745 = vsel %vm1744, %v1736, %v1741
        %v1746 = vmul.f32 %v1712, %v1735
        %v1747 = vmul.f32 %v1713, %v1745
        %v1748 = vperm.slane %v1090, 5
        %v1749 = vmul.f32 %v1746, %v1748
        %v1750 = vmul.f32 %v1747, %v1748
        %v1751 = vperm.slane %v1090, 6
        %v1752 = vadd.f32 %v1749, %v1751
        %v1753 = vadd.f32 %v1750, %v1751
        %1754 = vst.msk [vmem:[%s410] sm:$0xff] %vm435, %v1752
        %1755 = vst.msk [vmem:[%s410 + $0x8] sm:$0xff] %vm435, %v1753
        %p1756 = scmp.lt.s32.totalorder %s23, 1
        %s1757 = scalar_select %p1756, %s23, 1
        %s1758 = smul.addr %s1757, 2
        %s1759 = smul.addr %s1758, 8
        %s1760 = scalar_lea.vmem %s10, %s1759
        // Predicated region
        $region69: #{bottleneck_forward.1} parent=59 // pred_check
          %p1761 = pneg %p261
        $region70: #{bottleneck_forward.1} parent=59 // pred_check_branch
          %1763 = sbr.rel (%p1761) target = $region72
        $region71: #{bottleneck_forward.1} parent=59 // pred_region
          _
        $region72: #{bottleneck_forward.1} parent=59 // pred_fallthru
          _
      $region60: #{bottleneck_forward.1} parent=5 // pred_fallthru
        _
      %p1764 = scmp.le.s32.totalorder 2, %s18
      // Predicated region
      $region73: #{bottleneck_forward.1} parent=5 // pred_check
        %p1765 = pneg %p1764
      $region74: #{bottleneck_forward.1} parent=5 // pred_check_branch
        %1767 = sbr.rel (%p1765) target = $region76
      $region75: #{bottleneck_forward.1} parent=5 // pred_region
        %s1768 = ssub.s32 %s18, 2
        // Predicated region
        $region77: #{bottleneck_forward.1} parent=75 // pred_check
          %p1769 = pneg %p267
        $region78: #{bottleneck_forward.1} parent=75 // pred_check_branch
          %1771 = sbr.rel (%p1769) target = $region80
        $region79: #{bottleneck_forward.1} parent=75 // pred_region
          %p1772 = scmp.lt.s32.totalorder %s24, 1
          %s1773 = scalar_select %p1772, %s24, 1
          %s1774 = smul.addr %s1773, 2
          %s1775 = smul.addr %s1774, 8
          %s1776 = scalar_lea.vmem %s10, %s1775
        $region80: #{bottleneck_forward.1} parent=75 // pred_fallthru
          _
      $region76: #{bottleneck_forward.1} parent=5 // pred_fallthru
        _
    $region6: #{bottleneck_forward.1} parent=1 // loop_footer
      %s22 = sadd.s32 1, %s18
    $region7: #{bottleneck_forward.1} parent=1 // loop_footer_branch
      %17 = sbr.rel target = $region3
    $region8: #{bottleneck_forward.1} parent=1 // loop_exit
      _
    %1777 = vsyncpa [#allocation3], 1
    %s1778 = scalar_lea.sflag [#allocation3], 1
    %1779 = vsyncpa %s1778, 1
    %1780 = vsyncpa [#allocation5], 1

</llo_original>
